<compile_context>
chip_gen: v7x
topology: tpu7x:2x2x1
jax: 0.10.0
libtpu: 0.0.40
codegen_flags: <defaults>
</compile_context>

<pallas_src>
import functools

import jax
import jax.numpy as jnp
from jax import lax
from jax.experimental import pallas as pl
from jax.experimental.pallas import tpu as pltpu


def _attackers_fused_kernel(x_ref, w1_ref, b1_ref, w2_ref, b2_ref, lbl_ref,
                            preds_ref, nll_ref):
    """One batch tile, all attackers, fused MLP + cross-entropy + argmax.

    x_ref    : [bm, D]      activations tile (streams over the grid)
    w1_ref   : [D, A*H]     all attackers' first-layer weights (VMEM resident)
    b1_ref   : [1, A*H]
    w2_ref   : [A, H, C]    per-attacker second-layer weights (VMEM resident)
    b2_ref   : [A, 1, C]
    lbl_ref  : [bm, A]      int32 labels (batch on the sublane axis, like logits)
    preds_ref: [bm, A]      int32 argmax output
    nll_ref  : [bm, A]      f32 per-row cross-entropy (un-reduced)
    """
    A, H, C = w2_ref.shape
    bm = x_ref.shape[0]

    # Single wide first matmul: N = A*H keeps the MXU busy despite small K = D.
    h = jnp.dot(x_ref[...], w1_ref[...], preferred_element_type=jnp.float32)
    h = jnp.maximum(h + b1_ref[...], 0.0)                         # [bm, A*H]

    col = lax.broadcasted_iota(jnp.int32, (bm, C), 1)
    for a in range(A):                                            # A is small & static
        logits = jnp.dot(h[:, a * H:(a + 1) * H], w2_ref[a],
                         preferred_element_type=jnp.float32)
        logits = logits + b2_ref[a]                               # [bm, C]

        # Numerically stable log-sum-exp.
        m = jnp.max(logits, axis=-1, keepdims=True)
        lse = m + jnp.log(jnp.sum(jnp.exp(logits - m), axis=-1, keepdims=True))

        # Gather logits[row, label[row]] via one-hot select (C is tiny).
        lbl = lbl_ref[:, a:a + 1]                                 # [bm, 1] int32
        picked = jnp.sum(jnp.where(col == lbl, logits, 0.0),
                         axis=-1, keepdims=True)

        # argmax with first-match tie-breaking (manual form; reuses m).
        pred = jnp.min(jnp.where(logits == m, col, C), axis=-1, keepdims=True)

        preds_ref[:, a:a + 1] = pred.astype(jnp.int32)
        nll_ref[:, a:a + 1] = lse - picked


def fold_attackers_params(w1, b1, w2, b2):
    """One-time layout fold.  Call OUTSIDE the per-step jit (hoisted per review)."""
    A, D, H = w1.shape
    C = w2.shape[-1]
    w1_cat = jnp.transpose(w1, (1, 0, 2)).reshape(D, A * H)       # [D, A*H]
    b1_cat = b1.reshape(1, A * H)                                 # [1, A*H]
    w2_s = w2.reshape(A, H, C)                                    # [A, H, C]
    b2_s = b2.reshape(A, 1, C)                                    # [A, 1, C]
    return w1_cat, b1_cat, w2_s, b2_s


@functools.partial(jax.jit, static_argnames=("block_m",))
def attackers_forward(x, w1_cat, b1_cat, w2, b2, labels, *, block_m=1024):
    """Fused Attackers.forward -> (loss, preds[A, B]).  No logits are materialized.

    x: [B, D] f32.  (w1_cat, b1_cat, w2, b2) from fold_attackers_params.
    labels: [A, B] int.
    """
    if block_m % 128 != 0:
        raise ValueError("block_m must be a multiple of 128")
    B, D = x.shape
    A, H, C = w2.shape

    bm = B if B <= block_m else block_m            # single tile for small B
    n_tiles = pl.cdiv(B, bm)                       # ragged tail handled by masked stores

    labels_t = labels.T.astype(jnp.int32)          # [B, A] (batch on sublane axis)

    cost = pl.CostEstimate(
        flops=2 * B * D * A * H + 2 * B * A * H * C,
        transcendentals=A * B * (C + 1),
        bytes_accessed=4 * (B * D                          # x (read once)
                            + D * A * H + A * H            # W1/b1 (resident, read once)
                            + A * H * C + A * C            # W2/b2 (resident, read once)
                            + B * A                        # labels
                            + 2 * B * A),                  # preds + NLL writeback
    )

    preds_t, nll = pl.pallas_call(
        _attackers_fused_kernel,
        out_shape=(jax.ShapeDtypeStruct((B, A), jnp.int32),
                   jax.ShapeDtypeStruct((B, A), jnp.float32)),
        grid_spec=pltpu.PrefetchScalarGridSpec(
            num_scalar_prefetch=0,
            grid=(n_tiles,),
            in_specs=[
                pl.BlockSpec((bm, D), lambda m: (m, 0)),          # x tile (streams)
                pl.BlockSpec((D, A * H), lambda m: (0, 0)),       # W1 concat (resident)
                pl.BlockSpec((1, A * H), lambda m: (0, 0)),       # b1 concat (resident)
                pl.BlockSpec((A, H, C), lambda m: (0, 0, 0)),     # W2 stacked (resident)
                pl.BlockSpec((A, 1, C), lambda m: (0, 0, 0)),     # b2 stacked (resident)
                pl.BlockSpec((bm, A), lambda m: (m, 0)),          # labels tile
            ],
            out_specs=(
                pl.BlockSpec((bm, A), lambda m: (m, 0)),          # preds
                pl.BlockSpec((bm, A), lambda m: (m, 0)),          # per-row NLL
            ),
        ),
        compiler_params=pltpu.CompilerParams(
            dimension_semantics=("parallel",)),                   # v7x: 2 TCs share tiles
        cost_estimate=cost,
    )(x, w1_cat, b1_cat, w2, b2, labels_t)

    loss = jnp.sum(jnp.mean(nll, axis=0))          # mean over batch per attacker, summed
    return loss, preds_t.T                          # preds: [A, B]


def init_attackers_params(key, repr_dim, n_attack, hiddens=256, n_classes=2,
                          dtype=jnp.float32):
    """PyTorch-style U(-1/sqrt(fan_in), 1/sqrt(fan_in)) init, stacked over attackers.
    Weights stored pre-transposed as [in_features, out_features]."""
    k1, k2, k3, k4 = jax.random.split(key, 4)
    bound1 = 1.0 / (repr_dim ** 0.5)
    bound2 = 1.0 / (hiddens ** 0.5)
    w1 = jax.random.uniform(k1, (n_attack, repr_dim, hiddens), dtype, -bound1, bound1)
    b1 = jax.random.uniform(k2, (n_attack, hiddens), dtype, -bound1, bound1)
    w2 = jax.random.uniform(k3, (n_attack, hiddens, n_classes), dtype, -bound2, bound2)
    b2 = jax.random.uniform(k4, (n_attack, n_classes), dtype, -bound2, bound2)
    return w1, b1, w2, b2


def attackers_reference(x, w1, b1, w2, b2, labels):
    """Pure-JAX reference mirroring the PyTorch module."""
    h = jnp.maximum(jnp.einsum("bd,adh->abh", x, w1) + b1[:, None, :], 0.0)
    logits = jnp.einsum("abh,ahc->abc", h, w2) + b2[:, None, :]
    preds = jnp.argmax(logits, axis=-1)
    log_probs = jax.nn.log_softmax(logits, axis=-1)
    nll = -jnp.take_along_axis(log_probs, labels[..., None], axis=-1)[..., 0]
    loss = jnp.sum(jnp.mean(nll, axis=-1))
    return loss, preds, logits


if __name__ == "__main__":
    key = jax.random.PRNGKey(0)
    k_x, k_p, k_y, k_x2, k_y2 = jax.random.split(key, 5)

    repr_dim, hiddens, n_classes, n_attack = 32, 256, 2, 3

    w1, b1, w2, b2 = init_attackers_params(k_p, repr_dim, n_attack, hiddens, n_classes)
    folded = fold_attackers_params(w1, b1, w2, b2)   # hoisted out of the hot path

    # Case 1: small batch, single tile.
    B1 = 64
    x1 = jax.random.normal(k_x, (B1, repr_dim), jnp.float32)
    y1 = jax.random.randint(k_y, (n_attack, B1), 0, n_classes, dtype=jnp.int32)
    loss1, preds1 = attackers_forward(x1, *folded, y1)
    loss1, preds1 = jax.block_until_ready((loss1, preds1))
    ref_loss1, ref_preds1, _ = attackers_reference(x1, w1, b1, w2, b2, y1)
    assert preds1.shape == (n_attack, B1), preds1.shape
    assert jnp.allclose(loss1, ref_loss1, atol=1e-4, rtol=1e-5), (loss1, ref_loss1)
    assert jnp.array_equal(preds1, ref_preds1), "preds mismatch (case 1)"

    # Case 2: multi-tile grid with a ragged final tile (exercises masked tail stores).
    B2 = 200
    x2 = jax.random.normal(k_x2, (B2, repr_dim), jnp.float32)
    y2 = jax.random.randint(k_y2, (n_attack, B2), 0, n_classes, dtype=jnp.int32)
    loss2, preds2 = attackers_forward(x2, *folded, y2, block_m=128)
    loss2, preds2 = jax.block_until_ready((loss2, preds2))
    ref_loss2, ref_preds2, _ = attackers_reference(x2, w1, b1, w2, b2, y2)
    assert jnp.allclose(loss2, ref_loss2, atol=1e-4, rtol=1e-5), (loss2, ref_loss2)
    assert jnp.array_equal(preds2, ref_preds2), "preds mismatch (case 2)"

    print("KERNEL_OK")
</pallas_src>

<mosaic_0001>
module attributes {stable_mosaic.version = 11 : i64} {
  func.func @_attackers_fused_kernel(%arg0: i32, %arg1: memref<64x32xf32, #tpu.memory_space<vmem>>, %arg2: memref<32x768xf32, #tpu.memory_space<vmem>>, %arg3: memref<1x768xf32, #tpu.memory_space<vmem>>, %arg4: memref<3x256x2xf32, #tpu.memory_space<vmem>>, %arg5: memref<3x1x2xf32, #tpu.memory_space<vmem>>, %arg6: memref<64x3xi32, #tpu.memory_space<vmem>>, %arg7: memref<64x3xi32, #tpu.memory_space<vmem>>, %arg8: memref<64x3xf32, #tpu.memory_space<vmem>>) attributes {dimension_semantics = [#tpu.dimension_semantics<parallel>], iteration_bounds = array<i64: 1>, scalar_prefetch = 0 : i64, scratch_operands = 0 : i64, tpu.core_type = #tpu.core_type<tc>, window_params = [{transform_indices = @transform_0, window_bounds = array<i64: 64, 32>}, {pipeline_mode = #tpu.pipeline_mode<synchronous>, transform_indices = @transform_1, window_bounds = array<i64: 32, 768>}, {pipeline_mode = #tpu.pipeline_mode<synchronous>, transform_indices = @transform_2, window_bounds = array<i64: 1, 768>}, {pipeline_mode = #tpu.pipeline_mode<synchronous>, transform_indices = @transform_3, window_bounds = array<i64: 3, 256, 2>}, {pipeline_mode = #tpu.pipeline_mode<synchronous>, transform_indices = @transform_4, window_bounds = array<i64: 3, 1, 2>}, {transform_indices = @transform_5, window_bounds = array<i64: 64, 3>}, {transform_indices = @transform_6, window_bounds = array<i64: 64, 3>}, {transform_indices = @transform_7, window_bounds = array<i64: 64, 3>}]} {
    %c0 = arith.constant 0 : index
    %c0_0 = arith.constant 0 : index
    %0 = vector.load %arg1[%c0, %c0_0] : memref<64x32xf32, #tpu.memory_space<vmem>>, vector<64x32xf32>
    %c0_1 = arith.constant 0 : index
    %c0_2 = arith.constant 0 : index
    %1 = vector.load %arg2[%c0_1, %c0_2] : memref<32x768xf32, #tpu.memory_space<vmem>>, vector<32x768xf32>
    %cst = arith.constant dense<0.000000e+00> : vector<64x768xf32>
    %2 = tpu.matmul %0, %1, %cst {dimension_numbers = #tpu.dot_dimension_numbers<[1], [0], [0], [1], [0, 0, 1, 1], [], []>} : vector<64x32xf32>, vector<32x768xf32>, vector<64x768xf32> -> vector<64x768xf32>
    %c0_3 = arith.constant 0 : index
    %c0_4 = arith.constant 0 : index
    %3 = vector.load %arg3[%c0_3, %c0_4] : memref<1x768xf32, #tpu.memory_space<vmem>>, vector<1x768xf32>
    %4 = vector.broadcast %3 : vector<1x768xf32> to vector<64x768xf32>
    %5 = arith.addf %2, %4 : vector<64x768xf32>
    %cst_5 = arith.constant 0.000000e+00 : f32
    %6 = vector.broadcast %cst_5 : f32 to vector<64x768xf32>
    %7 = arith.maximumf %5, %6 : vector<64x768xf32>
    %8 = tpu.iota {dimensions = array<i32: 1>} : vector<64x2xi32>
    %9 = vector.extract_strided_slice %7 {offsets = [0, 0], sizes = [64, 256], strides = [1, 1]} : vector<64x768xf32> to vector<64x256xf32>
    %c0_6 = arith.constant 0 : index
    %c0_7 = arith.constant 0 : index
    %c0_8 = arith.constant 0 : index
    %10 = vector.load %arg4[%c0_6, %c0_7, %c0_8] : memref<3x256x2xf32, #tpu.memory_space<vmem>>, vector<1x256x2xf32>
    %11 = vector.shape_cast %10 : vector<1x256x2xf32> to vector<256x2xf32>
    %cst_9 = arith.constant dense<0.000000e+00> : vector<64x2xf32>
    %12 = tpu.matmul %9, %11, %cst_9 {dimension_numbers = #tpu.dot_dimension_numbers<[1], [0], [0], [1], [0, 0, 1, 1], [], []>} : vector<64x256xf32>, vector<256x2xf32>, vector<64x2xf32> -> vector<64x2xf32>
    %c0_10 = arith.constant 0 : index
    %c0_11 = arith.constant 0 : index
    %c0_12 = arith.constant 0 : index
    %13 = vector.load %arg5[%c0_10, %c0_11, %c0_12] : memref<3x1x2xf32, #tpu.memory_space<vmem>>, vector<1x1x2xf32>
    %14 = vector.shape_cast %13 : vector<1x1x2xf32> to vector<1x2xf32>
    %15 = vector.broadcast %14 : vector<1x2xf32> to vector<64x2xf32>
    %16 = arith.addf %12, %15 : vector<64x2xf32>
    %cst_13 = arith.constant dense<0xFF800000> : vector<64xf32>
    %17 = vector.multi_reduction <maximumf>, %16, %cst_13 [1] : vector<64x2xf32> to vector<64xf32>
    %18 = vector.shape_cast %17 : vector<64xf32> to vector<64x1xf32>
    %19 = vector.broadcast %18 : vector<64x1xf32> to vector<64x2xf32>
    %20 = arith.subf %16, %19 : vector<64x2xf32>
    %21 = math.exp %20 : vector<64x2xf32>
    %cst_14 = arith.constant dense<0.000000e+00> : vector<64xf32>
    %22 = vector.multi_reduction <add>, %21, %cst_14 [1] : vector<64x2xf32> to vector<64xf32>
    %23 = vector.shape_cast %22 : vector<64xf32> to vector<64x1xf32>
    %24 = math.log %23 : vector<64x1xf32>
    %25 = arith.addf %18, %24 : vector<64x1xf32>
    %c0_15 = arith.constant 0 : index
    %c0_16 = arith.constant 0 : index
    %26 = vector.load %arg6[%c0_15, %c0_16] : memref<64x3xi32, #tpu.memory_space<vmem>>, vector<64x1xi32>
    %27 = vector.broadcast %26 : vector<64x1xi32> to vector<64x2xi32>
    %28 = arith.cmpi eq, %8, %27 : vector<64x2xi32>
    %cst_17 = arith.constant 0.000000e+00 : f32
    %29 = vector.broadcast %cst_17 : f32 to vector<64x2xf32>
    %30 = arith.select %28, %16, %29 : vector<64x2xi1>, vector<64x2xf32>
    %cst_18 = arith.constant dense<0.000000e+00> : vector<64xf32>
    %31 = vector.multi_reduction <add>, %30, %cst_18 [1] : vector<64x2xf32> to vector<64xf32>
    %32 = vector.shape_cast %31 : vector<64xf32> to vector<64x1xf32>
    %33 = vector.broadcast %18 : vector<64x1xf32> to vector<64x2xf32>
    %34 = arith.cmpf oeq, %16, %33 : vector<64x2xf32>
    %c2_i32 = arith.constant 2 : i32
    %35 = vector.broadcast %c2_i32 : i32 to vector<64x2xi32>
    %36 = arith.select %34, %8, %35 : vector<64x2xi1>, vector<64x2xi32>
    %cst_19 = arith.constant dense<2147483647> : vector<64xi32>
    %37 = vector.multi_reduction <minsi>, %36, %cst_19 [1] : vector<64x2xi32> to vector<64xi32>
    %38 = vector.shape_cast %37 : vector<64xi32> to vector<64x1xi32>
    %c0_20 = arith.constant 0 : index
    %c0_21 = arith.constant 0 : index
    %39 = vector.load %arg7[%c0_20, %c0_21] : memref<64x3xi32, #tpu.memory_space<vmem>>, vector<64x1xi32>
    tpu.vector_store %arg7[%c0_20, %c0_21], %38 {strides = array<i32>} : memref<64x3xi32, #tpu.memory_space<vmem>>, vector<64x1xi32>,
    %40 = arith.subf %25, %32 : vector<64x1xf32>
    %c0_22 = arith.constant 0 : index
    %c0_23 = arith.constant 0 : index
    %41 = vector.load %arg8[%c0_22, %c0_23] : memref<64x3xf32, #tpu.memory_space<vmem>>, vector<64x1xf32>
    tpu.vector_store %arg8[%c0_22, %c0_23], %40 {strides = array<i32>} : memref<64x3xf32, #tpu.memory_space<vmem>>, vector<64x1xf32>,
    %42 = vector.extract_strided_slice %7 {offsets = [0, 256], sizes = [64, 256], strides = [1, 1]} : vector<64x768xf32> to vector<64x256xf32>
    %c1 = arith.constant 1 : index
    %c0_24 = arith.constant 0 : index
    %c0_25 = arith.constant 0 : index
    %43 = vector.load %arg4[%c1, %c0_24, %c0_25] : memref<3x256x2xf32, #tpu.memory_space<vmem>>, vector<1x256x2xf32>
    %44 = vector.shape_cast %43 : vector<1x256x2xf32> to vector<256x2xf32>
    %cst_26 = arith.constant dense<0.000000e+00> : vector<64x2xf32>
    %45 = tpu.matmul %42, %44, %cst_26 {dimension_numbers = #tpu.dot_dimension_numbers<[1], [0], [0], [1], [0, 0, 1, 1], [], []>} : vector<64x256xf32>, vector<256x2xf32>, vector<64x2xf32> -> vector<64x2xf32>
    %c1_27 = arith.constant 1 : index
    %c0_28 = arith.constant 0 : index
    %c0_29 = arith.constant 0 : index
    %46 = vector.load %arg5[%c1_27, %c0_28, %c0_29] : memref<3x1x2xf32, #tpu.memory_space<vmem>>, vector<1x1x2xf32>
    %47 = vector.shape_cast %46 : vector<1x1x2xf32> to vector<1x2xf32>
    %48 = vector.broadcast %47 : vector<1x2xf32> to vector<64x2xf32>
    %49 = arith.addf %45, %48 : vector<64x2xf32>
    %cst_30 = arith.constant dense<0xFF800000> : vector<64xf32>
    %50 = vector.multi_reduction <maximumf>, %49, %cst_30 [1] : vector<64x2xf32> to vector<64xf32>
    %51 = vector.shape_cast %50 : vector<64xf32> to vector<64x1xf32>
    %52 = vector.broadcast %51 : vector<64x1xf32> to vector<64x2xf32>
    %53 = arith.subf %49, %52 : vector<64x2xf32>
    %54 = math.exp %53 : vector<64x2xf32>
    %cst_31 = arith.constant dense<0.000000e+00> : vector<64xf32>
    %55 = vector.multi_reduction <add>, %54, %cst_31 [1] : vector<64x2xf32> to vector<64xf32>
    %56 = vector.shape_cast %55 : vector<64xf32> to vector<64x1xf32>
    %57 = math.log %56 : vector<64x1xf32>
    %58 = arith.addf %51, %57 : vector<64x1xf32>
    %c0_32 = arith.constant 0 : index
    %c1_33 = arith.constant 1 : index
    %59 = vector.load %arg6[%c0_32, %c1_33] : memref<64x3xi32, #tpu.memory_space<vmem>>, vector<64x1xi32>
    %60 = vector.broadcast %59 : vector<64x1xi32> to vector<64x2xi32>
    %61 = arith.cmpi eq, %8, %60 : vector<64x2xi32>
    %cst_34 = arith.constant 0.000000e+00 : f32
    %62 = vector.broadcast %cst_34 : f32 to vector<64x2xf32>
    %63 = arith.select %61, %49, %62 : vector<64x2xi1>, vector<64x2xf32>
    %cst_35 = arith.constant dense<0.000000e+00> : vector<64xf32>
    %64 = vector.multi_reduction <add>, %63, %cst_35 [1] : vector<64x2xf32> to vector<64xf32>
    %65 = vector.shape_cast %64 : vector<64xf32> to vector<64x1xf32>
    %66 = vector.broadcast %51 : vector<64x1xf32> to vector<64x2xf32>
    %67 = arith.cmpf oeq, %49, %66 : vector<64x2xf32>
    %c2_i32_36 = arith.constant 2 : i32
    %68 = vector.broadcast %c2_i32_36 : i32 to vector<64x2xi32>
    %69 = arith.select %67, %8, %68 : vector<64x2xi1>, vector<64x2xi32>
    %cst_37 = arith.constant dense<2147483647> : vector<64xi32>
    %70 = vector.multi_reduction <minsi>, %69, %cst_37 [1] : vector<64x2xi32> to vector<64xi32>
    %71 = vector.shape_cast %70 : vector<64xi32> to vector<64x1xi32>
    %c0_38 = arith.constant 0 : index
    %c1_39 = arith.constant 1 : index
    %72 = vector.load %arg7[%c0_38, %c1_39] : memref<64x3xi32, #tpu.memory_space<vmem>>, vector<64x1xi32>
    tpu.vector_store %arg7[%c0_38, %c1_39], %71 {strides = array<i32>} : memref<64x3xi32, #tpu.memory_space<vmem>>, vector<64x1xi32>,
    %73 = arith.subf %58, %65 : vector<64x1xf32>
    %c0_40 = arith.constant 0 : index
    %c1_41 = arith.constant 1 : index
    %74 = vector.load %arg8[%c0_40, %c1_41] : memref<64x3xf32, #tpu.memory_space<vmem>>, vector<64x1xf32>
    tpu.vector_store %arg8[%c0_40, %c1_41], %73 {strides = array<i32>} : memref<64x3xf32, #tpu.memory_space<vmem>>, vector<64x1xf32>,
    %75 = vector.extract_strided_slice %7 {offsets = [0, 512], sizes = [64, 256], strides = [1, 1]} : vector<64x768xf32> to vector<64x256xf32>
    %c2 = arith.constant 2 : index
    %c0_42 = arith.constant 0 : index
    %c0_43 = arith.constant 0 : index
    %76 = vector.load %arg4[%c2, %c0_42, %c0_43] : memref<3x256x2xf32, #tpu.memory_space<vmem>>, vector<1x256x2xf32>
    %77 = vector.shape_cast %76 : vector<1x256x2xf32> to vector<256x2xf32>
    %cst_44 = arith.constant dense<0.000000e+00> : vector<64x2xf32>
    %78 = tpu.matmul %75, %77, %cst_44 {dimension_numbers = #tpu.dot_dimension_numbers<[1], [0], [0], [1], [0, 0, 1, 1], [], []>} : vector<64x256xf32>, vector<256x2xf32>, vector<64x2xf32> -> vector<64x2xf32>
    %c2_45 = arith.constant 2 : index
    %c0_46 = arith.constant 0 : index
    %c0_47 = arith.constant 0 : index
    %79 = vector.load %arg5[%c2_45, %c0_46, %c0_47] : memref<3x1x2xf32, #tpu.memory_space<vmem>>, vector<1x1x2xf32>
    %80 = vector.shape_cast %79 : vector<1x1x2xf32> to vector<1x2xf32>
    %81 = vector.broadcast %80 : vector<1x2xf32> to vector<64x2xf32>
    %82 = arith.addf %78, %81 : vector<64x2xf32>
    %cst_48 = arith.constant dense<0xFF800000> : vector<64xf32>
    %83 = vector.multi_reduction <maximumf>, %82, %cst_48 [1] : vector<64x2xf32> to vector<64xf32>
    %84 = vector.shape_cast %83 : vector<64xf32> to vector<64x1xf32>
    %85 = vector.broadcast %84 : vector<64x1xf32> to vector<64x2xf32>
    %86 = arith.subf %82, %85 : vector<64x2xf32>
    %87 = math.exp %86 : vector<64x2xf32>
    %cst_49 = arith.constant dense<0.000000e+00> : vector<64xf32>
    %88 = vector.multi_reduction <add>, %87, %cst_49 [1] : vector<64x2xf32> to vector<64xf32>
    %89 = vector.shape_cast %88 : vector<64xf32> to vector<64x1xf32>
    %90 = math.log %89 : vector<64x1xf32>
    %91 = arith.addf %84, %90 : vector<64x1xf32>
    %c0_50 = arith.constant 0 : index
    %c2_51 = arith.constant 2 : index
    %92 = vector.load %arg6[%c0_50, %c2_51] : memref<64x3xi32, #tpu.memory_space<vmem>>, vector<64x1xi32>
    %93 = vector.broadcast %92 : vector<64x1xi32> to vector<64x2xi32>
    %94 = arith.cmpi eq, %8, %93 : vector<64x2xi32>
    %cst_52 = arith.constant 0.000000e+00 : f32
    %95 = vector.broadcast %cst_52 : f32 to vector<64x2xf32>
    %96 = arith.select %94, %82, %95 : vector<64x2xi1>, vector<64x2xf32>
    %cst_53 = arith.constant dense<0.000000e+00> : vector<64xf32>
    %97 = vector.multi_reduction <add>, %96, %cst_53 [1] : vector<64x2xf32> to vector<64xf32>
    %98 = vector.shape_cast %97 : vector<64xf32> to vector<64x1xf32>
    %99 = vector.broadcast %84 : vector<64x1xf32> to vector<64x2xf32>
    %100 = arith.cmpf oeq, %82, %99 : vector<64x2xf32>
    %c2_i32_54 = arith.constant 2 : i32
    %101 = vector.broadcast %c2_i32_54 : i32 to vector<64x2xi32>
    %102 = arith.select %100, %8, %101 : vector<64x2xi1>, vector<64x2xi32>
    %cst_55 = arith.constant dense<2147483647> : vector<64xi32>
    %103 = vector.multi_reduction <minsi>, %102, %cst_55 [1] : vector<64x2xi32> to vector<64xi32>
    %104 = vector.shape_cast %103 : vector<64xi32> to vector<64x1xi32>
    %c0_56 = arith.constant 0 : index
    %c2_57 = arith.constant 2 : index
    %105 = vector.load %arg7[%c0_56, %c2_57] : memref<64x3xi32, #tpu.memory_space<vmem>>, vector<64x1xi32>
    tpu.vector_store %arg7[%c0_56, %c2_57], %104 {strides = array<i32>} : memref<64x3xi32, #tpu.memory_space<vmem>>, vector<64x1xi32>,
    %106 = arith.subf %91, %98 : vector<64x1xf32>
    %c0_58 = arith.constant 0 : index
    %c2_59 = arith.constant 2 : index
    %107 = vector.load %arg8[%c0_58, %c2_59] : memref<64x3xf32, #tpu.memory_space<vmem>>, vector<64x1xf32>
    tpu.vector_store %arg8[%c0_58, %c2_59], %106 {strides = array<i32>} : memref<64x3xf32, #tpu.memory_space<vmem>>, vector<64x1xf32>,
    return
  }
  func.func @transform_0(%arg0: i32) -> (i32, i32) {
    %c0_i32 = arith.constant 0 : i32
    %c0_i32_0 = arith.constant 0 : i32
    return %arg0, %c0_i32 : i32, i32
  }
  func.func @transform_1(%arg0: i32) -> (i32, i32) {
    %c0_i32 = arith.constant 0 : i32
    %c0_i32_0 = arith.constant 0 : i32
    %c0_i32_1 = arith.constant 0 : i32
    return %c0_i32, %c0_i32_0 : i32, i32
  }
  func.func @transform_2(%arg0: i32) -> (i32, i32) {
    %c0_i32 = arith.constant 0 : i32
    %c0_i32_0 = arith.constant 0 : i32
    %c0_i32_1 = arith.constant 0 : i32
    return %c0_i32, %c0_i32_0 : i32, i32
  }
  func.func @transform_3(%arg0: i32) -> (i32, i32, i32) {
    %c0_i32 = arith.constant 0 : i32
    %c0_i32_0 = arith.constant 0 : i32
    %c0_i32_1 = arith.constant 0 : i32
    %c0_i32_2 = arith.constant 0 : i32
    return %c0_i32, %c0_i32_0, %c0_i32_1 : i32, i32, i32
  }
  func.func @transform_4(%arg0: i32) -> (i32, i32, i32) {
    %c0_i32 = arith.constant 0 : i32
    %c0_i32_0 = arith.constant 0 : i32
    %c0_i32_1 = arith.constant 0 : i32
    %c0_i32_2 = arith.constant 0 : i32
    return %c0_i32, %c0_i32_0, %c0_i32_1 : i32, i32, i32
  }
  func.func @transform_5(%arg0: i32) -> (i32, i32) {
    %c0_i32 = arith.constant 0 : i32
    %c0_i32_0 = arith.constant 0 : i32
    return %arg0, %c0_i32 : i32, i32
  }
  func.func @transform_6(%arg0: i32) -> (i32, i32) {
    %c0_i32 = arith.constant 0 : i32
    %c0_i32_0 = arith.constant 0 : i32
    return %arg0, %c0_i32 : i32, i32
  }
  func.func @transform_7(%arg0: i32) -> (i32, i32) {
    %c0_i32 = arith.constant 0 : i32
    %c0_i32_0 = arith.constant 0 : i32
    return %arg0, %c0_i32 : i32, i32
  }
}

</mosaic_0001>

<llo_original>
// kernel: attackers_forward.1
$region0: #{attackers_forward.1}
  #allocation0 [shape = 'u32[]', space=smem, size = 0x4, offset = 0x4, fixed_abs, tag = 'smem constant byte address 0x4 - core index']
  #allocation1 [shape = 'u32[144,128]{1,0:T(1,128)}', space=vmem, size = 0x12000, scoped, tag = 'internal scratch']
  %s0 = inlined_call_operand.vmem [shape: f32[64,32], index: 0, kind: input, shape index: {}]
  %s1 = inlined_call_operand.vmem [shape: f32[32,768], index: 1, kind: input, shape index: {}]
  %s2 = inlined_call_operand.vmem [shape: f32[1,768], index: 2, kind: input, shape index: {}]
  %s3 = inlined_call_operand.vmem [shape: f32[3,256,2], index: 3, kind: input, shape index: {}]
  %s4 = inlined_call_operand.vmem [shape: f32[3,1,2], index: 4, kind: input, shape index: {}]
  %s5 = inlined_call_operand.vmem [shape: s32[64,3], index: 5, kind: input, shape index: {}]
  %s6 = inlined_call_operand.vmem [shape: s32[64,3], index: 6, kind: output, shape index: {0}]
  %s7 = inlined_call_operand.vmem [shape: f32[64,3], index: 7, kind: output, shape index: {1}]
  %8 = xla_tuple %s6, %s7
  %s9 = sld [smem:[#allocation0]]
  $region42: #{attackers_forward.1} parent=0
    _
  %s11 = ssub.s32 1, %s9
  %s12 = scalar_select 0, %s11, %s9
  // Predicated region
  $region2: #{attackers_forward.1} parent=0 // pred_check
    _
  $region3: #{attackers_forward.1} parent=0 // pred_check_branch
    %14 = sbr.rel (0) target = $region5
  $region4: #{attackers_forward.1} parent=0 // pred_region
    _
  $region5: #{attackers_forward.1} parent=0 // pred_fallthru
    _
  // Predicated region
  $region6: #{attackers_forward.1} parent=0 // pred_check
    _
  $region7: #{attackers_forward.1} parent=0 // pred_check_branch
    %16 = sbr.rel (0) target = $region9
  $region8: #{attackers_forward.1} parent=0 // pred_region
    _
  $region9: #{attackers_forward.1} parent=0 // pred_fallthru
    _
  // Predicated region
  $region10: #{attackers_forward.1} parent=0 // pred_check
    _
  $region11: #{attackers_forward.1} parent=0 // pred_check_branch
    %18 = sbr.rel (0) target = $region13
  $region12: #{attackers_forward.1} parent=0 // pred_region
    _
  $region13: #{attackers_forward.1} parent=0 // pred_fallthru
    _
  // Predicated region
  $region14: #{attackers_forward.1} parent=0 // pred_check
    _
  $region15: #{attackers_forward.1} parent=0 // pred_check_branch
    %20 = sbr.rel (0) target = $region17
  $region16: #{attackers_forward.1} parent=0 // pred_region
    _
  $region17: #{attackers_forward.1} parent=0 // pred_fallthru
    _
  // Predicated region
  $region18: #{attackers_forward.1} parent=0 // pred_check
    _
  $region19: #{attackers_forward.1} parent=0 // pred_check_branch
    %22 = sbr.rel (0) target = $region21
  $region20: #{attackers_forward.1} parent=0 // pred_region
    _
  $region21: #{attackers_forward.1} parent=0 // pred_fallthru
    _
  // Predicated region
  $region22: #{attackers_forward.1} parent=0 // pred_check
    _
  $region23: #{attackers_forward.1} parent=0 // pred_check_branch
    %24 = sbr.rel (0) target = $region25
  $region24: #{attackers_forward.1} parent=0 // pred_region
    _
  $region25: #{attackers_forward.1} parent=0 // pred_fallthru
    _
  %v25 = vld [vmem:[%s0] sm:$0xff]
  %v26 = vld [vmem:[%s0 + $0x8] sm:$0xff]
  %v27 = vld [vmem:[%s0 + $0x10] sm:$0xff]
  %v28 = vld [vmem:[%s0 + $0x18] sm:$0xff]
  %v29 = vld [vmem:[%s0 + $0x20] sm:$0xff]
  %v30 = vld [vmem:[%s0 + $0x28] sm:$0xff]
  %v31 = vld [vmem:[%s0 + $0x30] sm:$0xff]
  %v32 = vld [vmem:[%s0 + $0x38] sm:$0xff]
  %v33 = vld [vmem:[%s1] sm:$0xff]
  %v34 = vld [vmem:[%s1 + $0x8] sm:$0xff]
  %v35 = vld [vmem:[%s1 + $0x10] sm:$0xff]
  %v36 = vld [vmem:[%s1 + $0x18] sm:$0xff]
  %v37 = vld [vmem:[%s1 + $0x20] sm:$0xff]
  %v38 = vld [vmem:[%s1 + $0x28] sm:$0xff]
  %v39 = vld [vmem:[%s1 + $0x30] sm:$0xff]
  %v40 = vld [vmem:[%s1 + $0x38] sm:$0xff]
  %v41 = vld [vmem:[%s1 + $0x40] sm:$0xff]
  %v42 = vld [vmem:[%s1 + $0x48] sm:$0xff]
  %v43 = vld [vmem:[%s1 + $0x50] sm:$0xff]
  %v44 = vld [vmem:[%s1 + $0x58] sm:$0xff]
  %v45 = vld [vmem:[%s1 + $0x60] sm:$0xff]
  %v46 = vld [vmem:[%s1 + $0x68] sm:$0xff]
  %v47 = vld [vmem:[%s1 + $0x70] sm:$0xff]
  %v48 = vld [vmem:[%s1 + $0x78] sm:$0xff]
  %v49 = vld [vmem:[%s1 + $0x80] sm:$0xff]
  %v50 = vld [vmem:[%s1 + $0x88] sm:$0xff]
  %v51 = vld [vmem:[%s1 + $0x90] sm:$0xff]
  %v52 = vld [vmem:[%s1 + $0x98] sm:$0xff]
  %v53 = vld [vmem:[%s1 + $0xa0] sm:$0xff]
  %v54 = vld [vmem:[%s1 + $0xa8] sm:$0xff]
  %v55 = vld [vmem:[%s1 + $0xb0] sm:$0xff]
  %v56 = vld [vmem:[%s1 + $0xb8] sm:$0xff]
  %v57 = vld [vmem:[%s2] sm:$0x3f]
  %v59 = vlaneseq
  %v60 = vshrl.u32 %v59, 7
  %v61 = vsub.s32 0, %v60
  %v62 = vrot.slane %v57, %v61
  %v63 = vlaneseq
  %v64 = vshrl.u32 %v63, 7
  %v65 = vsub.s32 1, %v64
  %v66 = vrot.slane %v57, %v65
  %v67 = vlaneseq
  %v68 = vshrl.u32 %v67, 7
  %v69 = vsub.s32 2, %v68
  %v70 = vrot.slane %v57, %v69
  %v71 = vlaneseq
  %v72 = vshrl.u32 %v71, 7
  %v73 = vsub.s32 3, %v72
  %v74 = vrot.slane %v57, %v73
  %v75 = vlaneseq
  %v76 = vshrl.u32 %v75, 7
  %v77 = vsub.s32 4, %v76
  %v78 = vrot.slane %v57, %v77
  %v79 = vlaneseq
  %v80 = vshrl.u32 %v79, 7
  %v81 = vsub.s32 5, %v80
  %v82 = vrot.slane %v57, %v81
  %vm89 = vcmask 261120
  %v91 = vsel %vm89, %v25, 0
  %v94 = vsel %vm89, %v26, 0
  %v97 = vsel %vm89, %v27, 0
  %v100 = vsel %vm89, %v28, 0
  %v103 = vsel %vm89, %v29, 0
  %v106 = vsel %vm89, %v30, 0
  %v109 = vsel %vm89, %v31, 0
  %v112 = vsel %vm89, %v32, 0
  %114 = vmatprep.subr.mxu0 %v34
  %115 = vmatpush1.msra.mxu0 %v33
  %116 = vmatprep.subr.mxu0 %v40
  %117 = vmatpush1.msra.mxu0 %v39
  %118 = vmatprep.subr.mxu0 %v46
  %119 = vmatpush1.msra.mxu0 %v45
  %120 = vmatprep.subr.mxu0 %v52
  %121 = vmatpush1.msra.mxu0 %v51
  %122 = vmatprep.subr.mxu0 0.0
  %123 = vmatpush1.msra.mxu0 0.0
  %124 = vmatprep.subr.mxu0 0.0
  %125 = vmatpush1.msra.mxu0 0.0
  %126 = vmatprep.subr.mxu0 0.0
  %127 = vmatpush1.msra.mxu0 0.0
  %128 = vmatprep.subr.mxu0 0.0
  %129 = vmatpush1.msra.mxu0 0.0
  %130 = vmatprep.subr.mxu0 0.0
  %131 = vmatpush1.msra.mxu0 0.0
  %132 = vmatprep.subr.mxu0 0.0
  %133 = vmatpush1.msra.mxu0 0.0
  %134 = vmatprep.subr.mxu0 0.0
  %135 = vmatpush1.msra.mxu0 0.0
  %136 = vmatprep.subr.mxu0 0.0
  %137 = vmatpush1.msra.mxu0 0.0
  %138 = vmatprep.subr.mxu0 0.0
  %139 = vmatpush1.msra.mxu0 0.0
  %140 = vmatprep.subr.mxu0 0.0
  %141 = vmatpush1.msra.mxu0 0.0
  %142 = vmatprep.subr.mxu0 0.0
  %143 = vmatpush1.msra.mxu0 0.0
  %144 = vmatprep.subr.mxu0 0.0
  %145 = vmatpush1.msra.mxu0 0.0
  %146 = vmatprep.subr.mxu0 0.0
  %147 = vmatpush1.msra.mxu0 0.0
  %148 = vmatprep.subr.mxu0 0.0
  %149 = vmatpush1.msra.mxu0 0.0
  %150 = vmatprep.subr.mxu0 0.0
  %151 = vmatpush1.msra.mxu0 0.0
  %152 = vmatprep.subr.mxu0 0.0
  %153 = vmatpush1.msra.mxu0 0.0
  %154 = vmatprep.subr.mxu0 0.0
  %155 = vmatpush1.msra.mxu0 0.0
  %156 = vmatprep.subr.mxu0 0.0
  %157 = vmatpush1.msra.mxu0 0.0
  %158 = vmatprep.subr.mxu0 0.0
  %159 = vmatpush1.msra.mxu0 0.0
  %160 = vmatprep.subr.mxu0 0.0
  %161 = vmatpush1.msra.mxu0 0.0
  %162 = vmatprep.subr.mxu0 0.0
  %163 = vmatpush1.msra.mxu0 0.0
  %164 = vmatprep.subr.mxu0 0.0
  %165 = vmatpush1.msra.mxu0 0.0
  %166 = vmatprep.subr.mxu0 0.0
  %167 = vmatpush1.msra.mxu0 0.0
  %168 = vmatprep.subr.mxu0 0.0
  %169 = vmatpush1.msra.mxu0 0.0
  %170 = vmatprep.subr.mxu0 0.0
  %171 = vmatpush1.msra.mxu0 0.0
  %172 = vmatprep.subr.mxu0 0.0
  %173 = vmatpush1.msra.mxu0 0.0
  %174 = vmatprep.subr.mxu0 0.0
  %175 = vmatpush1.msra.mxu0 0.0
  %176 = vmatprep.subr.mxu0 0.0
  %177 = vmatpush1.msra.mxu0 0.0
  %178 = vmatprep.mubr.f32.mxu0 0.0
  %179 = vmatmul.mubr.f32.gmra.mrb[0].mxu0 %v91
  %v180 = vpop.f32.mrb[0].mxu0
  %v181 = vadd.f32 %v62, %v180
  %v182 = vpop.f32.mrb[0].mxu0
  %v183 = vadd.f32 %v66, %v182
  %184 = vmatprep.mubr.f32.mxu0 0.0
  %185 = vmatmul.mubr.f32.gmra.mrb[0].mxu0 %v94
  %v186 = vpop.f32.mrb[0].mxu0
  %v187 = vadd.f32 %v62, %v186
  %v188 = vpop.f32.mrb[0].mxu0
  %v189 = vadd.f32 %v66, %v188
  %190 = vmatprep.mubr.f32.mxu0 0.0
  %191 = vmatmul.mubr.f32.gmra.mrb[0].mxu0 %v97
  %v192 = vpop.f32.mrb[0].mxu0
  %v193 = vadd.f32 %v62, %v192
  %v194 = vpop.f32.mrb[0].mxu0
  %v195 = vadd.f32 %v66, %v194
  %196 = vmatprep.mubr.f32.mxu0 0.0
  %197 = vmatmul.mubr.f32.gmra.mrb[0].mxu0 %v100
  %v198 = vpop.f32.mrb[0].mxu0
  %v199 = vadd.f32 %v62, %v198
  %v200 = vpop.f32.mrb[0].mxu0
  %v201 = vadd.f32 %v66, %v200
  %202 = vmatprep.mubr.f32.mxu0 0.0
  %203 = vmatmul.mubr.f32.gmra.mrb[0].mxu0 %v103
  %v204 = vpop.f32.mrb[0].mxu0
  %v205 = vadd.f32 %v62, %v204
  %v206 = vpop.f32.mrb[0].mxu0
  %v207 = vadd.f32 %v66, %v206
  %208 = vmatprep.mubr.f32.mxu0 0.0
  %209 = vmatmul.mubr.f32.gmra.mrb[0].mxu0 %v106
  %v210 = vpop.f32.mrb[0].mxu0
  %v211 = vadd.f32 %v62, %v210
  %v212 = vpop.f32.mrb[0].mxu0
  %v213 = vadd.f32 %v66, %v212
  %214 = vmatprep.mubr.f32.mxu0 0.0
  %215 = vmatmul.mubr.f32.gmra.mrb[0].mxu0 %v109
  %v216 = vpop.f32.mrb[0].mxu0
  %v217 = vadd.f32 %v62, %v216
  %v218 = vpop.f32.mrb[0].mxu0
  %v219 = vadd.f32 %v66, %v218
  %220 = vmatprep.mubr.f32.mxu0 0.0
  %221 = vmatmul.mubr.f32.gmra.mrb[0].mxu0 %v112
  %v222 = vpop.f32.mrb[0].mxu0
  %v223 = vadd.f32 %v62, %v222
  %v224 = vpop.f32.mrb[0].mxu0
  %v225 = vadd.f32 %v66, %v224
  %226 = vdwg.mxu0
  %227 = vmatprep.subr.mxu0 %v36
  %228 = vmatpush1.msra.mxu0 %v35
  %229 = vmatprep.subr.mxu0 %v42
  %230 = vmatpush1.msra.mxu0 %v41
  %231 = vmatprep.subr.mxu0 %v48
  %232 = vmatpush1.msra.mxu0 %v47
  %233 = vmatprep.subr.mxu0 %v54
  %234 = vmatpush1.msra.mxu0 %v53
  %235 = vmatprep.subr.mxu0 0.0
  %236 = vmatpush1.msra.mxu0 0.0
  %237 = vmatprep.subr.mxu0 0.0
  %238 = vmatpush1.msra.mxu0 0.0
  %239 = vmatprep.subr.mxu0 0.0
  %240 = vmatpush1.msra.mxu0 0.0
  %241 = vmatprep.subr.mxu0 0.0
  %242 = vmatpush1.msra.mxu0 0.0
  %243 = vmatprep.subr.mxu0 0.0
  %244 = vmatpush1.msra.mxu0 0.0
  %245 = vmatprep.subr.mxu0 0.0
  %246 = vmatpush1.msra.mxu0 0.0
  %247 = vmatprep.subr.mxu0 0.0
  %248 = vmatpush1.msra.mxu0 0.0
  %249 = vmatprep.subr.mxu0 0.0
  %250 = vmatpush1.msra.mxu0 0.0
  %251 = vmatprep.subr.mxu0 0.0
  %252 = vmatpush1.msra.mxu0 0.0
  %253 = vmatprep.subr.mxu0 0.0
  %254 = vmatpush1.msra.mxu0 0.0
  %255 = vmatprep.subr.mxu0 0.0
  %256 = vmatpush1.msra.mxu0 0.0
  %257 = vmatprep.subr.mxu0 0.0
  %258 = vmatpush1.msra.mxu0 0.0
  %259 = vmatprep.subr.mxu0 0.0
  %260 = vmatpush1.msra.mxu0 0.0
  %261 = vmatprep.subr.mxu0 0.0
  %262 = vmatpush1.msra.mxu0 0.0
  %263 = vmatprep.subr.mxu0 0.0
  %264 = vmatpush1.msra.mxu0 0.0
  %265 = vmatprep.subr.mxu0 0.0
  %266 = vmatpush1.msra.mxu0 0.0
  %267 = vmatprep.subr.mxu0 0.0
  %268 = vmatpush1.msra.mxu0 0.0
  %269 = vmatprep.subr.mxu0 0.0
  %270 = vmatpush1.msra.mxu0 0.0
  %271 = vmatprep.subr.mxu0 0.0
  %272 = vmatpush1.msra.mxu0 0.0
  %273 = vmatprep.subr.mxu0 0.0
  %274 = vmatpush1.msra.mxu0 0.0
  %275 = vmatprep.subr.mxu0 0.0
  %276 = vmatpush1.msra.mxu0 0.0
  %277 = vmatprep.subr.mxu0 0.0
  %278 = vmatpush1.msra.mxu0 0.0
  %279 = vmatprep.subr.mxu0 0.0
  %280 = vmatpush1.msra.mxu0 0.0
  %281 = vmatprep.subr.mxu0 0.0
  %282 = vmatpush1.msra.mxu0 0.0
  %283 = vmatprep.subr.mxu0 0.0
  %284 = vmatpush1.msra.mxu0 0.0
  %285 = vmatprep.subr.mxu0 0.0
  %286 = vmatpush1.msra.mxu0 0.0
  %287 = vmatprep.subr.mxu0 0.0
  %288 = vmatpush1.msra.mxu0 0.0
  %289 = vmatprep.subr.mxu0 0.0
  %290 = vmatpush1.msra.mxu0 0.0
  %291 = vmatprep.mubr.f32.mxu0 0.0
  %292 = vmatmul.mubr.f32.gmra.mrb[0].mxu0 %v91
  %v293 = vpop.f32.mrb[0].mxu0
  %v294 = vadd.f32 %v70, %v293
  %v295 = vpop.f32.mrb[0].mxu0
  %v296 = vadd.f32 %v74, %v295
  %297 = vmatprep.mubr.f32.mxu0 0.0
  %298 = vmatmul.mubr.f32.gmra.mrb[0].mxu0 %v94
  %v299 = vpop.f32.mrb[0].mxu0
  %v300 = vadd.f32 %v70, %v299
  %v301 = vpop.f32.mrb[0].mxu0
  %v302 = vadd.f32 %v74, %v301
  %303 = vmatprep.mubr.f32.mxu0 0.0
  %304 = vmatmul.mubr.f32.gmra.mrb[0].mxu0 %v97
  %v305 = vpop.f32.mrb[0].mxu0
  %v306 = vadd.f32 %v70, %v305
  %v307 = vpop.f32.mrb[0].mxu0
  %v308 = vadd.f32 %v74, %v307
  %309 = vmatprep.mubr.f32.mxu0 0.0
  %310 = vmatmul.mubr.f32.gmra.mrb[0].mxu0 %v100
  %v311 = vpop.f32.mrb[0].mxu0
  %v312 = vadd.f32 %v70, %v311
  %v313 = vpop.f32.mrb[0].mxu0
  %v314 = vadd.f32 %v74, %v313
  %315 = vmatprep.mubr.f32.mxu0 0.0
  %316 = vmatmul.mubr.f32.gmra.mrb[0].mxu0 %v103
  %v317 = vpop.f32.mrb[0].mxu0
  %v318 = vadd.f32 %v70, %v317
  %v319 = vpop.f32.mrb[0].mxu0
  %v320 = vadd.f32 %v74, %v319
  %321 = vmatprep.mubr.f32.mxu0 0.0
  %322 = vmatmul.mubr.f32.gmra.mrb[0].mxu0 %v106
  %v323 = vpop.f32.mrb[0].mxu0
  %v324 = vadd.f32 %v70, %v323
  %v325 = vpop.f32.mrb[0].mxu0
  %v326 = vadd.f32 %v74, %v325
  %327 = vmatprep.mubr.f32.mxu0 0.0
  %328 = vmatmul.mubr.f32.gmra.mrb[0].mxu0 %v109
  %v329 = vpop.f32.mrb[0].mxu0
  %v330 = vadd.f32 %v70, %v329
  %v331 = vpop.f32.mrb[0].mxu0
  %v332 = vadd.f32 %v74, %v331
  %333 = vmatprep.mubr.f32.mxu0 0.0
  %334 = vmatmul.mubr.f32.gmra.mrb[0].mxu0 %v112
  %v335 = vpop.f32.mrb[0].mxu0
  %v336 = vadd.f32 %v70, %v335
  %v337 = vpop.f32.mrb[0].mxu0
  %v338 = vadd.f32 %v74, %v337
  %339 = vdwg.mxu0
  %340 = vmatprep.subr.mxu0 %v38
  %341 = vmatpush1.msra.mxu0 %v37
  %342 = vmatprep.subr.mxu0 %v44
  %343 = vmatpush1.msra.mxu0 %v43
  %344 = vmatprep.subr.mxu0 %v50
  %345 = vmatpush1.msra.mxu0 %v49
  %346 = vmatprep.subr.mxu0 %v56
  %347 = vmatpush1.msra.mxu0 %v55
  %348 = vmatprep.subr.mxu0 0.0
  %349 = vmatpush1.msra.mxu0 0.0
  %350 = vmatprep.subr.mxu0 0.0
  %351 = vmatpush1.msra.mxu0 0.0
  %352 = vmatprep.subr.mxu0 0.0
  %353 = vmatpush1.msra.mxu0 0.0
  %354 = vmatprep.subr.mxu0 0.0
  %355 = vmatpush1.msra.mxu0 0.0
  %356 = vmatprep.subr.mxu0 0.0
  %357 = vmatpush1.msra.mxu0 0.0
  %358 = vmatprep.subr.mxu0 0.0
  %359 = vmatpush1.msra.mxu0 0.0
  %360 = vmatprep.subr.mxu0 0.0
  %361 = vmatpush1.msra.mxu0 0.0
  %362 = vmatprep.subr.mxu0 0.0
  %363 = vmatpush1.msra.mxu0 0.0
  %364 = vmatprep.subr.mxu0 0.0
  %365 = vmatpush1.msra.mxu0 0.0
  %366 = vmatprep.subr.mxu0 0.0
  %367 = vmatpush1.msra.mxu0 0.0
  %368 = vmatprep.subr.mxu0 0.0
  %369 = vmatpush1.msra.mxu0 0.0
  %370 = vmatprep.subr.mxu0 0.0
  %371 = vmatpush1.msra.mxu0 0.0
  %372 = vmatprep.subr.mxu0 0.0
  %373 = vmatpush1.msra.mxu0 0.0
  %374 = vmatprep.subr.mxu0 0.0
  %375 = vmatpush1.msra.mxu0 0.0
  %376 = vmatprep.subr.mxu0 0.0
  %377 = vmatpush1.msra.mxu0 0.0
  %378 = vmatprep.subr.mxu0 0.0
  %379 = vmatpush1.msra.mxu0 0.0
  %380 = vmatprep.subr.mxu0 0.0
  %381 = vmatpush1.msra.mxu0 0.0
  %382 = vmatprep.subr.mxu0 0.0
  %383 = vmatpush1.msra.mxu0 0.0
  %384 = vmatprep.subr.mxu0 0.0
  %385 = vmatpush1.msra.mxu0 0.0
  %386 = vmatprep.subr.mxu0 0.0
  %387 = vmatpush1.msra.mxu0 0.0
  %388 = vmatprep.subr.mxu0 0.0
  %389 = vmatpush1.msra.mxu0 0.0
  %390 = vmatprep.subr.mxu0 0.0
  %391 = vmatpush1.msra.mxu0 0.0
  %392 = vmatprep.subr.mxu0 0.0
  %393 = vmatpush1.msra.mxu0 0.0
  %394 = vmatprep.subr.mxu0 0.0
  %395 = vmatpush1.msra.mxu0 0.0
  %396 = vmatprep.subr.mxu0 0.0
  %397 = vmatpush1.msra.mxu0 0.0
  %398 = vmatprep.subr.mxu0 0.0
  %399 = vmatpush1.msra.mxu0 0.0
  %400 = vmatprep.subr.mxu0 0.0
  %401 = vmatpush1.msra.mxu0 0.0
  %402 = vmatprep.subr.mxu0 0.0
  %403 = vmatpush1.msra.mxu0 0.0
  %404 = vmatprep.mubr.f32.mxu0 0.0
  %405 = vmatmul.mubr.f32.gmra.mrb[0].mxu0 %v91
  %v406 = vpop.f32.mrb[0].mxu0
  %v407 = vadd.f32 %v78, %v406
  %v408 = vpop.f32.mrb[0].mxu0
  %v409 = vadd.f32 %v82, %v408
  %410 = vmatprep.mubr.f32.mxu0 0.0
  %411 = vmatmul.mubr.f32.gmra.mrb[0].mxu0 %v94
  %v412 = vpop.f32.mrb[0].mxu0
  %v413 = vadd.f32 %v78, %v412
  %v414 = vpop.f32.mrb[0].mxu0
  %v415 = vadd.f32 %v82, %v414
  %416 = vmatprep.mubr.f32.mxu0 0.0
  %417 = vmatmul.mubr.f32.gmra.mrb[0].mxu0 %v97
  %v418 = vpop.f32.mrb[0].mxu0
  %v419 = vadd.f32 %v78, %v418
  %v420 = vpop.f32.mrb[0].mxu0
  %v421 = vadd.f32 %v82, %v420
  %422 = vmatprep.mubr.f32.mxu0 0.0
  %423 = vmatmul.mubr.f32.gmra.mrb[0].mxu0 %v100
  %v424 = vpop.f32.mrb[0].mxu0
  %v425 = vadd.f32 %v78, %v424
  %v426 = vpop.f32.mrb[0].mxu0
  %v427 = vadd.f32 %v82, %v426
  %428 = vmatprep.mubr.f32.mxu0 0.0
  %429 = vmatmul.mubr.f32.gmra.mrb[0].mxu0 %v103
  %v430 = vpop.f32.mrb[0].mxu0
  %v431 = vadd.f32 %v78, %v430
  %v432 = vpop.f32.mrb[0].mxu0
  %v433 = vadd.f32 %v82, %v432
  %434 = vmatprep.mubr.f32.mxu0 0.0
  %435 = vmatmul.mubr.f32.gmra.mrb[0].mxu0 %v106
  %v436 = vpop.f32.mrb[0].mxu0
  %v437 = vadd.f32 %v78, %v436
  %v438 = vpop.f32.mrb[0].mxu0
  %v439 = vadd.f32 %v82, %v438
  %440 = vmatprep.mubr.f32.mxu0 0.0
  %441 = vmatmul.mubr.f32.gmra.mrb[0].mxu0 %v109
  %v442 = vpop.f32.mrb[0].mxu0
  %v443 = vadd.f32 %v78, %v442
  %v444 = vpop.f32.mrb[0].mxu0
  %v445 = vadd.f32 %v82, %v444
  %446 = vmatprep.mubr.f32.mxu0 0.0
  %447 = vmatmul.mubr.f32.gmra.mrb[0].mxu0 %v112
  %v448 = vpop.f32.mrb[0].mxu0
  %v449 = vadd.f32 %v78, %v448
  %v450 = vpop.f32.mrb[0].mxu0
  %v451 = vadd.f32 %v82, %v450
  %452 = vdwg.mxu0
  %v453 = vmax.f32 %v181, 0.0
  %v454 = vmax.f32 %v183, 0.0
  %v455 = vmax.f32 %v294, 0.0
  %v456 = vmax.f32 %v296, 0.0
  %v457 = vmax.f32 %v407, 0.0
  %v458 = vmax.f32 %v409, 0.0
  %v459 = vmax.f32 %v187, 0.0
  %v460 = vmax.f32 %v189, 0.0
  %v461 = vmax.f32 %v300, 0.0
  %v462 = vmax.f32 %v302, 0.0
  %v463 = vmax.f32 %v413, 0.0
  %v464 = vmax.f32 %v415, 0.0
  %v465 = vmax.f32 %v193, 0.0
  %v466 = vmax.f32 %v195, 0.0
  %v467 = vmax.f32 %v306, 0.0
  %v468 = vmax.f32 %v308, 0.0
  %v469 = vmax.f32 %v419, 0.0
  %v470 = vmax.f32 %v421, 0.0
  %v471 = vmax.f32 %v199, 0.0
  %v472 = vmax.f32 %v201, 0.0
  %v473 = vmax.f32 %v312, 0.0
  %v474 = vmax.f32 %v314, 0.0
  %v475 = vmax.f32 %v425, 0.0
  %v476 = vmax.f32 %v427, 0.0
  %v477 = vmax.f32 %v205, 0.0
  %v478 = vmax.f32 %v207, 0.0
  %v479 = vmax.f32 %v318, 0.0
  %v480 = vmax.f32 %v320, 0.0
  %v481 = vmax.f32 %v431, 0.0
  %v482 = vmax.f32 %v433, 0.0
  %v483 = vmax.f32 %v211, 0.0
  %v484 = vmax.f32 %v213, 0.0
  %v485 = vmax.f32 %v324, 0.0
  %v486 = vmax.f32 %v326, 0.0
  %v487 = vmax.f32 %v437, 0.0
  %v488 = vmax.f32 %v439, 0.0
  %v489 = vmax.f32 %v217, 0.0
  %v490 = vmax.f32 %v219, 0.0
  %v491 = vmax.f32 %v330, 0.0
  %v492 = vmax.f32 %v332, 0.0
  %v493 = vmax.f32 %v443, 0.0
  %v494 = vmax.f32 %v445, 0.0
  %v495 = vmax.f32 %v223, 0.0
  %v496 = vmax.f32 %v225, 0.0
  %v497 = vmax.f32 %v336, 0.0
  %v498 = vmax.f32 %v338, 0.0
  %v499 = vmax.f32 %v449, 0.0
  %v500 = vmax.f32 %v451, 0.0
  %v501 = vlaneseq
  %v502 = vand.u32 %v501, 127
  %v503 = vld [vmem:[%s3] sm:$0xff]
  %v504 = vld [vmem:[%s3 + $0x8] sm:$0xff]
  %v505 = vld [vmem:[%s3 + $0x10] sm:$0xff]
  %v506 = vld [vmem:[%s3 + $0x18] sm:$0xff]
  %v507 = vld [vmem:[%s3 + $0x20] sm:$0xff]
  %v508 = vld [vmem:[%s3 + $0x28] sm:$0xff]
  %v509 = vld [vmem:[%s3 + $0x30] sm:$0xff]
  %v510 = vld [vmem:[%s3 + $0x38] sm:$0xff]
  %v511 = vld [vmem:[%s3 + $0x40] sm:$0xff]
  %v512 = vld [vmem:[%s3 + $0x48] sm:$0xff]
  %v513 = vld [vmem:[%s3 + $0x50] sm:$0xff]
  %v514 = vld [vmem:[%s3 + $0x58] sm:$0xff]
  %v515 = vld [vmem:[%s3 + $0x60] sm:$0xff]
  %v516 = vld [vmem:[%s3 + $0x68] sm:$0xff]
  %v517 = vld [vmem:[%s3 + $0x70] sm:$0xff]
  %v518 = vld [vmem:[%s3 + $0x78] sm:$0xff]
  %v519 = vld [vmem:[%s3 + $0x80] sm:$0xff]
  %v520 = vld [vmem:[%s3 + $0x88] sm:$0xff]
  %v521 = vld [vmem:[%s3 + $0x90] sm:$0xff]
  %v522 = vld [vmem:[%s3 + $0x98] sm:$0xff]
  %v523 = vld [vmem:[%s3 + $0xa0] sm:$0xff]
  %v524 = vld [vmem:[%s3 + $0xa8] sm:$0xff]
  %v525 = vld [vmem:[%s3 + $0xb0] sm:$0xff]
  %v526 = vld [vmem:[%s3 + $0xb8] sm:$0xff]
  %v527 = vld [vmem:[%s3 + $0xc0] sm:$0xff]
  %v528 = vld [vmem:[%s3 + $0xc8] sm:$0xff]
  %v529 = vld [vmem:[%s3 + $0xd0] sm:$0xff]
  %v530 = vld [vmem:[%s3 + $0xd8] sm:$0xff]
  %v531 = vld [vmem:[%s3 + $0xe0] sm:$0xff]
  %v532 = vld [vmem:[%s3 + $0xe8] sm:$0xff]
  %v533 = vld [vmem:[%s3 + $0xf0] sm:$0xff]
  %v534 = vld [vmem:[%s3 + $0xf8] sm:$0xff]
  %v535 = vld [vmem:[%s4] sm:$0x1]
  %v537 = vlaneseq
  %v538 = vshrl.u32 %v537, 7
  %v539 = vsub.s32 0, %v538
  %v540 = vrot.slane %v535, %v539
  %542 = vmatprep.subr.mxu0 0.0
  %543 = vmatpush1.msra.mxu0 %v503
  %544 = vmatprep.subr.mxu0 0.0
  %545 = vmatpush1.msra.mxu0 %v504
  %546 = vmatprep.subr.mxu0 0.0
  %547 = vmatpush1.msra.mxu0 %v505
  %548 = vmatprep.subr.mxu0 0.0
  %549 = vmatpush1.msra.mxu0 %v506
  %550 = vmatprep.subr.mxu0 0.0
  %551 = vmatpush1.msra.mxu0 %v507
  %552 = vmatprep.subr.mxu0 0.0
  %553 = vmatpush1.msra.mxu0 %v508
  %554 = vmatprep.subr.mxu0 0.0
  %555 = vmatpush1.msra.mxu0 %v509
  %556 = vmatprep.subr.mxu0 0.0
  %557 = vmatpush1.msra.mxu0 %v510
  %558 = vmatprep.subr.mxu0 0.0
  %559 = vmatpush1.msra.mxu0 %v511
  %560 = vmatprep.subr.mxu0 0.0
  %561 = vmatpush1.msra.mxu0 %v512
  %562 = vmatprep.subr.mxu0 0.0
  %563 = vmatpush1.msra.mxu0 %v513
  %564 = vmatprep.subr.mxu0 0.0
  %565 = vmatpush1.msra.mxu0 %v514
  %566 = vmatprep.subr.mxu0 0.0
  %567 = vmatpush1.msra.mxu0 %v515
  %568 = vmatprep.subr.mxu0 0.0
  %569 = vmatpush1.msra.mxu0 %v516
  %570 = vmatprep.subr.mxu0 0.0
  %571 = vmatpush1.msra.mxu0 %v517
  %572 = vmatprep.subr.mxu0 0.0
  %573 = vmatpush1.msra.mxu0 %v518
  %574 = vmatprep.subr.mxu0 0.0
  %575 = vmatpush1.msra.mxu0 %v519
  %576 = vmatprep.subr.mxu0 0.0
  %577 = vmatpush1.msra.mxu0 %v520
  %578 = vmatprep.subr.mxu0 0.0
  %579 = vmatpush1.msra.mxu0 %v521
  %580 = vmatprep.subr.mxu0 0.0
  %581 = vmatpush1.msra.mxu0 %v522
  %582 = vmatprep.subr.mxu0 0.0
  %583 = vmatpush1.msra.mxu0 %v523
  %584 = vmatprep.subr.mxu0 0.0
  %585 = vmatpush1.msra.mxu0 %v524
  %586 = vmatprep.subr.mxu0 0.0
  %587 = vmatpush1.msra.mxu0 %v525
  %588 = vmatprep.subr.mxu0 0.0
  %589 = vmatpush1.msra.mxu0 %v526
  %590 = vmatprep.subr.mxu0 0.0
  %591 = vmatpush1.msra.mxu0 %v527
  %592 = vmatprep.subr.mxu0 0.0
  %593 = vmatpush1.msra.mxu0 %v528
  %594 = vmatprep.subr.mxu0 0.0
  %595 = vmatpush1.msra.mxu0 %v529
  %596 = vmatprep.subr.mxu0 0.0
  %597 = vmatpush1.msra.mxu0 %v530
  %598 = vmatprep.subr.mxu0 0.0
  %599 = vmatpush1.msra.mxu0 %v531
  %600 = vmatprep.subr.mxu0 0.0
  %601 = vmatpush1.msra.mxu0 %v532
  %602 = vmatprep.subr.mxu0 0.0
  %603 = vmatpush1.msra.mxu0 %v533
  %604 = vmatprep.subr.mxu0 0.0
  %605 = vmatpush1.msra.mxu0 %v534
  %606 = vmatprep.mubr.f32.mxu0 %v454
  %607 = vmatmul.mubr.f32.gmra.mrb[0].mxu0 %v453
  %v608 = vpop.f32.mrb[0].mxu0
  %v609 = vadd.f32 %v540, %v608
  %v610 = vpop.f32.mrb[0].mxu0
  %611 = vmatprep.mubr.f32.mxu0 %v460
  %612 = vmatmul.mubr.f32.gmra.mrb[0].mxu0 %v459
  %v613 = vpop.f32.mrb[0].mxu0
  %v614 = vadd.f32 %v540, %v613
  %v615 = vpop.f32.mrb[0].mxu0
  %616 = vmatprep.mubr.f32.mxu0 %v466
  %617 = vmatmul.mubr.f32.gmra.mrb[0].mxu0 %v465
  %v618 = vpop.f32.mrb[0].mxu0
  %v619 = vadd.f32 %v540, %v618
  %v620 = vpop.f32.mrb[0].mxu0
  %621 = vmatprep.mubr.f32.mxu0 %v472
  %622 = vmatmul.mubr.f32.gmra.mrb[0].mxu0 %v471
  %v623 = vpop.f32.mrb[0].mxu0
  %v624 = vadd.f32 %v540, %v623
  %v625 = vpop.f32.mrb[0].mxu0
  %626 = vmatprep.mubr.f32.mxu0 %v478
  %627 = vmatmul.mubr.f32.gmra.mrb[0].mxu0 %v477
  %v628 = vpop.f32.mrb[0].mxu0
  %v629 = vadd.f32 %v540, %v628
  %v630 = vpop.f32.mrb[0].mxu0
  %631 = vmatprep.mubr.f32.mxu0 %v484
  %632 = vmatmul.mubr.f32.gmra.mrb[0].mxu0 %v483
  %v633 = vpop.f32.mrb[0].mxu0
  %v634 = vadd.f32 %v540, %v633
  %v635 = vpop.f32.mrb[0].mxu0
  %636 = vmatprep.mubr.f32.mxu0 %v490
  %637 = vmatmul.mubr.f32.gmra.mrb[0].mxu0 %v489
  %v638 = vpop.f32.mrb[0].mxu0
  %v639 = vadd.f32 %v540, %v638
  %v640 = vpop.f32.mrb[0].mxu0
  %641 = vmatprep.mubr.f32.mxu0 %v496
  %642 = vmatmul.mubr.f32.gmra.mrb[0].mxu0 %v495
  %v643 = vpop.f32.mrb[0].mxu0
  %v644 = vadd.f32 %v540, %v643
  %v645 = vpop.f32.mrb[0].mxu0
  %646 = vdwg.mxu0
  %vm647 = vcmask 15360
  %v648 = vsel %vm647, %v609, -inf
  %649 = vmax.xlane.f32.xlu0 %v648
  %v650 = vpop.xlane.xlu0 %649
  %v651 = vsel %vm647, %v614, -inf
  %652 = vmax.xlane.f32.xlu0 %v651
  %v653 = vpop.xlane.xlu0 %652
  %v654 = vsel %vm647, %v619, -inf
  %655 = vmax.xlane.f32.xlu0 %v654
  %v656 = vpop.xlane.xlu0 %655
  %v657 = vsel %vm647, %v624, -inf
  %658 = vmax.xlane.f32.xlu0 %v657
  %v659 = vpop.xlane.xlu0 %658
  %v660 = vsel %vm647, %v629, -inf
  %661 = vmax.xlane.f32.xlu0 %v660
  %v662 = vpop.xlane.xlu0 %661
  %v663 = vsel %vm647, %v634, -inf
  %664 = vmax.xlane.f32.xlu0 %v663
  %v665 = vpop.xlane.xlu0 %664
  %v666 = vsel %vm647, %v639, -inf
  %667 = vmax.xlane.f32.xlu0 %v666
  %v668 = vpop.xlane.xlu0 %667
  %v669 = vsel %vm647, %v644, -inf
  %670 = vmax.xlane.f32.xlu0 %v669
  %v671 = vpop.xlane.xlu0 %670
  %v672 = vsub.f32 %v609, %v650
  %v673 = vsub.f32 %v614, %v653
  %v674 = vsub.f32 %v619, %v656
  %v675 = vsub.f32 %v624, %v659
  %v676 = vsub.f32 %v629, %v662
  %v677 = vsub.f32 %v634, %v665
  %v678 = vsub.f32 %v639, %v668
  %v679 = vsub.f32 %v644, %v671
  %v680 = vmul.f32 %v672, 1.442695
  %v681 = vpow.pop %v680
  %v682 = vmul.f32 %v673, 1.442695
  %v683 = vpow.pop %v682
  %v684 = vmul.f32 %v674, 1.442695
  %v685 = vpow.pop %v684
  %v686 = vmul.f32 %v675, 1.442695
  %v687 = vpow.pop %v686
  %v688 = vmul.f32 %v676, 1.442695
  %v689 = vpow.pop %v688
  %v690 = vmul.f32 %v677, 1.442695
  %v691 = vpow.pop %v690
  %v692 = vmul.f32 %v678, 1.442695
  %v693 = vpow.pop %v692
  %v694 = vmul.f32 %v679, 1.442695
  %v695 = vpow.pop %v694
  %v696 = vsel %vm647, %v681, 0.0
  %697 = vadd.xlane.f32.xlu0 %v696
  %v698 = vpop.xlane.xlu0 %697
  %v699 = vsel %vm647, %v683, 0.0
  %700 = vadd.xlane.f32.xlu0 %v699
  %v701 = vpop.xlane.xlu0 %700
  %v702 = vsel %vm647, %v685, 0.0
  %703 = vadd.xlane.f32.xlu0 %v702
  %v704 = vpop.xlane.xlu0 %703
  %v705 = vsel %vm647, %v687, 0.0
  %706 = vadd.xlane.f32.xlu0 %v705
  %v707 = vpop.xlane.xlu0 %706
  %v708 = vsel %vm647, %v689, 0.0
  %709 = vadd.xlane.f32.xlu0 %v708
  %v710 = vpop.xlane.xlu0 %709
  %v711 = vsel %vm647, %v691, 0.0
  %712 = vadd.xlane.f32.xlu0 %v711
  %v713 = vpop.xlane.xlu0 %712
  %v714 = vsel %vm647, %v693, 0.0
  %715 = vadd.xlane.f32.xlu0 %v714
  %v716 = vpop.xlane.xlu0 %715
  %v717 = vsel %vm647, %v695, 0.0
  %718 = vadd.xlane.f32.xlu0 %v717
  %v719 = vpop.xlane.xlu0 %718
  %v720 = vlog2.pop %v698
  %v721 = vmul.f32 %v720, 0.6931472
  %v722 = vlog2.pop %v701
  %v723 = vmul.f32 %v722, 0.6931472
  %v724 = vlog2.pop %v704
  %v725 = vmul.f32 %v724, 0.6931472
  %v726 = vlog2.pop %v707
  %v727 = vmul.f32 %v726, 0.6931472
  %v728 = vlog2.pop %v710
  %v729 = vmul.f32 %v728, 0.6931472
  %v730 = vlog2.pop %v713
  %v731 = vmul.f32 %v730, 0.6931472
  %v732 = vlog2.pop %v716
  %v733 = vmul.f32 %v732, 0.6931472
  %v734 = vlog2.pop %v719
  %v735 = vmul.f32 %v734, 0.6931472
  %v736 = vadd.f32 %v650, %v721
  %v737 = vadd.f32 %v653, %v723
  %v738 = vadd.f32 %v656, %v725
  %v739 = vadd.f32 %v659, %v727
  %v740 = vadd.f32 %v662, %v729
  %v741 = vadd.f32 %v665, %v731
  %v742 = vadd.f32 %v668, %v733
  %v743 = vadd.f32 %v671, %v735
  %v744 = vld [vmem:[%s5] sm:$0xff]
  %v745 = vld [vmem:[%s5 + $0x8] sm:$0xff]
  %v746 = vld [vmem:[%s5 + $0x10] sm:$0xff]
  %v747 = vld [vmem:[%s5 + $0x18] sm:$0xff]
  %v748 = vld [vmem:[%s5 + $0x20] sm:$0xff]
  %v749 = vld [vmem:[%s5 + $0x28] sm:$0xff]
  %v750 = vld [vmem:[%s5 + $0x30] sm:$0xff]
  %v751 = vld [vmem:[%s5 + $0x38] sm:$0xff]
  %752 = vset.pattern.permute.xlu0 0
  %753 = vperm.xlu0 %752, %v744
  %v754 = vpop.permute.xlu0 %753
  %755 = vset.pattern.permute.xlu0 0
  %756 = vperm.xlu0 %755, %v745
  %v757 = vpop.permute.xlu0 %756
  %758 = vset.pattern.permute.xlu0 0
  %759 = vperm.xlu0 %758, %v746
  %v760 = vpop.permute.xlu0 %759
  %761 = vset.pattern.permute.xlu0 0
  %762 = vperm.xlu0 %761, %v747
  %v763 = vpop.permute.xlu0 %762
  %764 = vset.pattern.permute.xlu0 0
  %765 = vperm.xlu0 %764, %v748
  %v766 = vpop.permute.xlu0 %765
  %767 = vset.pattern.permute.xlu0 0
  %768 = vperm.xlu0 %767, %v749
  %v769 = vpop.permute.xlu0 %768
  %770 = vset.pattern.permute.xlu0 0
  %771 = vperm.xlu0 %770, %v750
  %v772 = vpop.permute.xlu0 %771
  %773 = vset.pattern.permute.xlu0 0
  %774 = vperm.xlu0 %773, %v751
  %v775 = vpop.permute.xlu0 %774
  %vm776 = vcmp.eq.s32.totalorder %v502, %v754
  %vm777 = vcmp.eq.s32.totalorder %v502, %v757
  %vm778 = vcmp.eq.s32.totalorder %v502, %v760
  %vm779 = vcmp.eq.s32.totalorder %v502, %v763
  %vm780 = vcmp.eq.s32.totalorder %v502, %v766
  %vm781 = vcmp.eq.s32.totalorder %v502, %v769
  %vm782 = vcmp.eq.s32.totalorder %v502, %v772
  %vm783 = vcmp.eq.s32.totalorder %v502, %v775
  %v784 = vsel %vm776, %v609, 0.0
  %v785 = vsel %vm777, %v614, 0.0
  %v786 = vsel %vm778, %v619, 0.0
  %v787 = vsel %vm779, %v624, 0.0
  %v788 = vsel %vm780, %v629, 0.0
  %v789 = vsel %vm781, %v634, 0.0
  %v790 = vsel %vm782, %v639, 0.0
  %v791 = vsel %vm783, %v644, 0.0
  %v792 = vsel %vm647, %v784, 0.0
  %793 = vadd.xlane.f32.xlu0 %v792
  %v794 = vpop.xlane.xlu0 %793
  %v795 = vsel %vm647, %v785, 0.0
  %796 = vadd.xlane.f32.xlu0 %v795
  %v797 = vpop.xlane.xlu0 %796
  %v798 = vsel %vm647, %v786, 0.0
  %799 = vadd.xlane.f32.xlu0 %v798
  %v800 = vpop.xlane.xlu0 %799
  %v801 = vsel %vm647, %v787, 0.0
  %802 = vadd.xlane.f32.xlu0 %v801
  %v803 = vpop.xlane.xlu0 %802
  %v804 = vsel %vm647, %v788, 0.0
  %805 = vadd.xlane.f32.xlu0 %v804
  %v806 = vpop.xlane.xlu0 %805
  %v807 = vsel %vm647, %v789, 0.0
  %808 = vadd.xlane.f32.xlu0 %v807
  %v809 = vpop.xlane.xlu0 %808
  %v810 = vsel %vm647, %v790, 0.0
  %811 = vadd.xlane.f32.xlu0 %v810
  %v812 = vpop.xlane.xlu0 %811
  %v813 = vsel %vm647, %v791, 0.0
  %814 = vadd.xlane.f32.xlu0 %v813
  %v815 = vpop.xlane.xlu0 %814
  %vm816 = vcmp.eq.f32.partialorder %v609, %v650
  %vm817 = vcmp.eq.f32.partialorder %v614, %v653
  %vm818 = vcmp.eq.f32.partialorder %v619, %v656
  %vm819 = vcmp.eq.f32.partialorder %v624, %v659
  %vm820 = vcmp.eq.f32.partialorder %v629, %v662
  %vm821 = vcmp.eq.f32.partialorder %v634, %v665
  %vm822 = vcmp.eq.f32.partialorder %v639, %v668
  %vm823 = vcmp.eq.f32.partialorder %v644, %v671
  %v824 = vsel %vm816, %v502, 2
  %v825 = vsel %vm817, %v502, 2
  %v826 = vsel %vm818, %v502, 2
  %v827 = vsel %vm819, %v502, 2
  %v828 = vsel %vm820, %v502, 2
  %v829 = vsel %vm821, %v502, 2
  %v830 = vsel %vm822, %v502, 2
  %v831 = vsel %vm823, %v502, 2
  %v832 = vsel %vm647, %v824, 2147483647
  %v833 = vand.u32 %v832, 65535
  %v834 = vshra.s32 %v832, 16
  %v835 = vcvt.s32.f32 %v833
  %v836 = vcvt.s32.f32 %v834
  %837 = vmin.xlane.f32.xlu0 %v836
  %v838 = vpop.xlane.xlu0 %837
  %vm839 = vcmp.eq.f32.partialorder %v836, %v838
  %v840 = vsel %vm839, %v835, inf
  %841 = vmin.xlane.f32.xlu0 %v840
  %v842 = vpop.xlane.xlu0 %841
  %v843 = vcvt.f32.s32 %v842
  %v844 = vcvt.f32.s32 %v838
  %v845 = vshll.u32 %v844, 16
  %v846 = vadd.s32 %v845, %v843
  %v847 = vsel %vm647, %v825, 2147483647
  %v848 = vand.u32 %v847, 65535
  %v849 = vshra.s32 %v847, 16
  %v850 = vcvt.s32.f32 %v848
  %v851 = vcvt.s32.f32 %v849
  %852 = vmin.xlane.f32.xlu0 %v851
  %v853 = vpop.xlane.xlu0 %852
  %vm854 = vcmp.eq.f32.partialorder %v851, %v853
  %v855 = vsel %vm854, %v850, inf
  %856 = vmin.xlane.f32.xlu0 %v855
  %v857 = vpop.xlane.xlu0 %856
  %v858 = vcvt.f32.s32 %v857
  %v859 = vcvt.f32.s32 %v853
  %v860 = vshll.u32 %v859, 16
  %v861 = vadd.s32 %v860, %v858
  %v862 = vsel %vm647, %v826, 2147483647
  %v863 = vand.u32 %v862, 65535
  %v864 = vshra.s32 %v862, 16
  %v865 = vcvt.s32.f32 %v863
  %v866 = vcvt.s32.f32 %v864
  %867 = vmin.xlane.f32.xlu0 %v866
  %v868 = vpop.xlane.xlu0 %867
  %vm869 = vcmp.eq.f32.partialorder %v866, %v868
  %v870 = vsel %vm869, %v865, inf
  %871 = vmin.xlane.f32.xlu0 %v870
  %v872 = vpop.xlane.xlu0 %871
  %v873 = vcvt.f32.s32 %v872
  %v874 = vcvt.f32.s32 %v868
  %v875 = vshll.u32 %v874, 16
  %v876 = vadd.s32 %v875, %v873
  %v877 = vsel %vm647, %v827, 2147483647
  %v878 = vand.u32 %v877, 65535
  %v879 = vshra.s32 %v877, 16
  %v880 = vcvt.s32.f32 %v878
  %v881 = vcvt.s32.f32 %v879
  %882 = vmin.xlane.f32.xlu0 %v881
  %v883 = vpop.xlane.xlu0 %882
  %vm884 = vcmp.eq.f32.partialorder %v881, %v883
  %v885 = vsel %vm884, %v880, inf
  %886 = vmin.xlane.f32.xlu0 %v885
  %v887 = vpop.xlane.xlu0 %886
  %v888 = vcvt.f32.s32 %v887
  %v889 = vcvt.f32.s32 %v883
  %v890 = vshll.u32 %v889, 16
  %v891 = vadd.s32 %v890, %v888
  %v892 = vsel %vm647, %v828, 2147483647
  %v893 = vand.u32 %v892, 65535
  %v894 = vshra.s32 %v892, 16
  %v895 = vcvt.s32.f32 %v893
  %v896 = vcvt.s32.f32 %v894
  %897 = vmin.xlane.f32.xlu0 %v896
  %v898 = vpop.xlane.xlu0 %897
  %vm899 = vcmp.eq.f32.partialorder %v896, %v898
  %v900 = vsel %vm899, %v895, inf
  %901 = vmin.xlane.f32.xlu0 %v900
  %v902 = vpop.xlane.xlu0 %901
  %v903 = vcvt.f32.s32 %v902
  %v904 = vcvt.f32.s32 %v898
  %v905 = vshll.u32 %v904, 16
  %v906 = vadd.s32 %v905, %v903
  %v907 = vsel %vm647, %v829, 2147483647
  %v908 = vand.u32 %v907, 65535
  %v909 = vshra.s32 %v907, 16
  %v910 = vcvt.s32.f32 %v908
  %v911 = vcvt.s32.f32 %v909
  %912 = vmin.xlane.f32.xlu0 %v911
  %v913 = vpop.xlane.xlu0 %912
  %vm914 = vcmp.eq.f32.partialorder %v911, %v913
  %v915 = vsel %vm914, %v910, inf
  %916 = vmin.xlane.f32.xlu0 %v915
  %v917 = vpop.xlane.xlu0 %916
  %v918 = vcvt.f32.s32 %v917
  %v919 = vcvt.f32.s32 %v913
  %v920 = vshll.u32 %v919, 16
  %v921 = vadd.s32 %v920, %v918
  %v922 = vsel %vm647, %v830, 2147483647
  %v923 = vand.u32 %v922, 65535
  %v924 = vshra.s32 %v922, 16
  %v925 = vcvt.s32.f32 %v923
  %v926 = vcvt.s32.f32 %v924
  %927 = vmin.xlane.f32.xlu0 %v926
  %v928 = vpop.xlane.xlu0 %927
  %vm929 = vcmp.eq.f32.partialorder %v926, %v928
  %v930 = vsel %vm929, %v925, inf
  %931 = vmin.xlane.f32.xlu0 %v930
  %v932 = vpop.xlane.xlu0 %931
  %v933 = vcvt.f32.s32 %v932
  %v934 = vcvt.f32.s32 %v928
  %v935 = vshll.u32 %v934, 16
  %v936 = vadd.s32 %v935, %v933
  %v937 = vsel %vm647, %v831, 2147483647
  %v938 = vand.u32 %v937, 65535
  %v939 = vshra.s32 %v937, 16
  %v940 = vcvt.s32.f32 %v938
  %v941 = vcvt.s32.f32 %v939
  %942 = vmin.xlane.f32.xlu0 %v941
  %v943 = vpop.xlane.xlu0 %942
  %vm944 = vcmp.eq.f32.partialorder %v941, %v943
  %v945 = vsel %vm944, %v940, inf
  %946 = vmin.xlane.f32.xlu0 %v945
  %v947 = vpop.xlane.xlu0 %946
  %v948 = vcvt.f32.s32 %v947
  %v949 = vcvt.f32.s32 %v943
  %v950 = vshll.u32 %v949, 16
  %v951 = vadd.s32 %v950, %v948
  %vm952 = vcmask 7168
  %953 = vst.msk [vmem:[%s6] sm:$0xff] %vm952, %v846
  %954 = vst.msk [vmem:[%s6 + $0x8] sm:$0xff] %vm952, %v861
  %955 = vst.msk [vmem:[%s6 + $0x10] sm:$0xff] %vm952, %v876
  %956 = vst.msk [vmem:[%s6 + $0x18] sm:$0xff] %vm952, %v891
  %957 = vst.msk [vmem:[%s6 + $0x20] sm:$0xff] %vm952, %v906
  %958 = vst.msk [vmem:[%s6 + $0x28] sm:$0xff] %vm952, %v921
  %959 = vst.msk [vmem:[%s6 + $0x30] sm:$0xff] %vm952, %v936
  %960 = vst.msk [vmem:[%s6 + $0x38] sm:$0xff] %vm952, %v951
  %v961 = vsub.f32 %v736, %v794
  %v962 = vsub.f32 %v737, %v797
  %v963 = vsub.f32 %v738, %v800
  %v964 = vsub.f32 %v739, %v803
  %v965 = vsub.f32 %v740, %v806
  %v966 = vsub.f32 %v741, %v809
  %v967 = vsub.f32 %v742, %v812
  %v968 = vsub.f32 %v743, %v815
  %969 = vst.msk [vmem:[%s7] sm:$0xff] %vm952, %v961
  %970 = vst.msk [vmem:[%s7 + $0x8] sm:$0xff] %vm952, %v962
  %971 = vst.msk [vmem:[%s7 + $0x10] sm:$0xff] %vm952, %v963
  %972 = vst.msk [vmem:[%s7 + $0x18] sm:$0xff] %vm952, %v964
  %973 = vst.msk [vmem:[%s7 + $0x20] sm:$0xff] %vm952, %v965
  %974 = vst.msk [vmem:[%s7 + $0x28] sm:$0xff] %vm952, %v966
  %975 = vst.msk [vmem:[%s7 + $0x30] sm:$0xff] %vm952, %v967
  %976 = vst.msk [vmem:[%s7 + $0x38] sm:$0xff] %vm952, %v968
  %s977 = scalar_lea.vmem %s3, 256
  %v978 = vld [vmem:[%s977] sm:$0xff]
  %v979 = vld [vmem:[%s977 + $0x8] sm:$0xff]
  %v980 = vld [vmem:[%s977 + $0x10] sm:$0xff]
  %v981 = vld [vmem:[%s977 + $0x18] sm:$0xff]
  %v982 = vld [vmem:[%s977 + $0x20] sm:$0xff]
  %v983 = vld [vmem:[%s977 + $0x28] sm:$0xff]
  %v984 = vld [vmem:[%s977 + $0x30] sm:$0xff]
  %v985 = vld [vmem:[%s977 + $0x38] sm:$0xff]
  %v986 = vld [vmem:[%s977 + $0x40] sm:$0xff]
  %v987 = vld [vmem:[%s977 + $0x48] sm:$0xff]
  %v988 = vld [vmem:[%s977 + $0x50] sm:$0xff]
  %v989 = vld [vmem:[%s977 + $0x58] sm:$0xff]
  %v990 = vld [vmem:[%s977 + $0x60] sm:$0xff]
  %v991 = vld [vmem:[%s977 + $0x68] sm:$0xff]
  %v992 = vld [vmem:[%s977 + $0x70] sm:$0xff]
  %v993 = vld [vmem:[%s977 + $0x78] sm:$0xff]
  %v994 = vld [vmem:[%s977 + $0x80] sm:$0xff]
  %v995 = vld [vmem:[%s977 + $0x88] sm:$0xff]
  %v996 = vld [vmem:[%s977 + $0x90] sm:$0xff]
  %v997 = vld [vmem:[%s977 + $0x98] sm:$0xff]
  %v998 = vld [vmem:[%s977 + $0xa0] sm:$0xff]
  %v999 = vld [vmem:[%s977 + $0xa8] sm:$0xff]
  %v1000 = vld [vmem:[%s977 + $0xb0] sm:$0xff]
  %v1001 = vld [vmem:[%s977 + $0xb8] sm:$0xff]
  %v1002 = vld [vmem:[%s977 + $0xc0] sm:$0xff]
  %v1003 = vld [vmem:[%s977 + $0xc8] sm:$0xff]
  %v1004 = vld [vmem:[%s977 + $0xd0] sm:$0xff]
  %v1005 = vld [vmem:[%s977 + $0xd8] sm:$0xff]
  %v1006 = vld [vmem:[%s977 + $0xe0] sm:$0xff]
  %v1007 = vld [vmem:[%s977 + $0xe8] sm:$0xff]
  %v1008 = vld [vmem:[%s977 + $0xf0] sm:$0xff]
  %v1009 = vld [vmem:[%s977 + $0xf8] sm:$0xff]
  %s1010 = scalar_lea.vmem %s4, 1
  %v1011 = vld [vmem:[%s1010] sm:$0x1]
  %v1013 = vlaneseq
  %v1014 = vshrl.u32 %v1013, 7
  %v1015 = vsub.s32 0, %v1014
  %v1016 = vrot.slane %v1011, %v1015
  %1018 = vmatprep.subr.mxu0 0.0
  %1019 = vmatpush1.msra.mxu0 %v978
  %1020 = vmatprep.subr.mxu0 0.0
  %1021 = vmatpush1.msra.mxu0 %v979
  %1022 = vmatprep.subr.mxu0 0.0
  %1023 = vmatpush1.msra.mxu0 %v980
  %1024 = vmatprep.subr.mxu0 0.0
  %1025 = vmatpush1.msra.mxu0 %v981
  %1026 = vmatprep.subr.mxu0 0.0
  %1027 = vmatpush1.msra.mxu0 %v982
  %1028 = vmatprep.subr.mxu0 0.0
  %1029 = vmatpush1.msra.mxu0 %v983
  %1030 = vmatprep.subr.mxu0 0.0
  %1031 = vmatpush1.msra.mxu0 %v984
  %1032 = vmatprep.subr.mxu0 0.0
  %1033 = vmatpush1.msra.mxu0 %v985
  %1034 = vmatprep.subr.mxu0 0.0
  %1035 = vmatpush1.msra.mxu0 %v986
  %1036 = vmatprep.subr.mxu0 0.0
  %1037 = vmatpush1.msra.mxu0 %v987
  %1038 = vmatprep.subr.mxu0 0.0
  %1039 = vmatpush1.msra.mxu0 %v988
  %1040 = vmatprep.subr.mxu0 0.0
  %1041 = vmatpush1.msra.mxu0 %v989
  %1042 = vmatprep.subr.mxu0 0.0
  %1043 = vmatpush1.msra.mxu0 %v990
  %1044 = vmatprep.subr.mxu0 0.0
  %1045 = vmatpush1.msra.mxu0 %v991
  %1046 = vmatprep.subr.mxu0 0.0
  %1047 = vmatpush1.msra.mxu0 %v992
  %1048 = vmatprep.subr.mxu0 0.0
  %1049 = vmatpush1.msra.mxu0 %v993
  %1050 = vmatprep.subr.mxu0 0.0
  %1051 = vmatpush1.msra.mxu0 %v994
  %1052 = vmatprep.subr.mxu0 0.0
  %1053 = vmatpush1.msra.mxu0 %v995
  %1054 = vmatprep.subr.mxu0 0.0
  %1055 = vmatpush1.msra.mxu0 %v996
  %1056 = vmatprep.subr.mxu0 0.0
  %1057 = vmatpush1.msra.mxu0 %v997
  %1058 = vmatprep.subr.mxu0 0.0
  %1059 = vmatpush1.msra.mxu0 %v998
  %1060 = vmatprep.subr.mxu0 0.0
  %1061 = vmatpush1.msra.mxu0 %v999
  %1062 = vmatprep.subr.mxu0 0.0
  %1063 = vmatpush1.msra.mxu0 %v1000
  %1064 = vmatprep.subr.mxu0 0.0
  %1065 = vmatpush1.msra.mxu0 %v1001
  %1066 = vmatprep.subr.mxu0 0.0
  %1067 = vmatpush1.msra.mxu0 %v1002
  %1068 = vmatprep.subr.mxu0 0.0
  %1069 = vmatpush1.msra.mxu0 %v1003
  %1070 = vmatprep.subr.mxu0 0.0
  %1071 = vmatpush1.msra.mxu0 %v1004
  %1072 = vmatprep.subr.mxu0 0.0
  %1073 = vmatpush1.msra.mxu0 %v1005
  %1074 = vmatprep.subr.mxu0 0.0
  %1075 = vmatpush1.msra.mxu0 %v1006
  %1076 = vmatprep.subr.mxu0 0.0
  %1077 = vmatpush1.msra.mxu0 %v1007
  %1078 = vmatprep.subr.mxu0 0.0
  %1079 = vmatpush1.msra.mxu0 %v1008
  %1080 = vmatprep.subr.mxu0 0.0
  %1081 = vmatpush1.msra.mxu0 %v1009
  %1082 = vmatprep.mubr.f32.mxu0 %v456
  %1083 = vmatmul.mubr.f32.gmra.mrb[0].mxu0 %v455
  %v1084 = vpop.f32.mrb[0].mxu0
  %v1085 = vadd.f32 %v1016, %v1084
  %v1086 = vpop.f32.mrb[0].mxu0
  %1087 = vmatprep.mubr.f32.mxu0 %v462
  %1088 = vmatmul.mubr.f32.gmra.mrb[0].mxu0 %v461
  %v1089 = vpop.f32.mrb[0].mxu0
  %v1090 = vadd.f32 %v1016, %v1089
  %v1091 = vpop.f32.mrb[0].mxu0
  %1092 = vmatprep.mubr.f32.mxu0 %v468
  %1093 = vmatmul.mubr.f32.gmra.mrb[0].mxu0 %v467
  %v1094 = vpop.f32.mrb[0].mxu0
  %v1095 = vadd.f32 %v1016, %v1094
  %v1096 = vpop.f32.mrb[0].mxu0
  %1097 = vmatprep.mubr.f32.mxu0 %v474
  %1098 = vmatmul.mubr.f32.gmra.mrb[0].mxu0 %v473
  %v1099 = vpop.f32.mrb[0].mxu0
  %v1100 = vadd.f32 %v1016, %v1099
  %v1101 = vpop.f32.mrb[0].mxu0
  %1102 = vmatprep.mubr.f32.mxu0 %v480
  %1103 = vmatmul.mubr.f32.gmra.mrb[0].mxu0 %v479
  %v1104 = vpop.f32.mrb[0].mxu0
  %v1105 = vadd.f32 %v1016, %v1104
  %v1106 = vpop.f32.mrb[0].mxu0
  %1107 = vmatprep.mubr.f32.mxu0 %v486
  %1108 = vmatmul.mubr.f32.gmra.mrb[0].mxu0 %v485
  %v1109 = vpop.f32.mrb[0].mxu0
  %v1110 = vadd.f32 %v1016, %v1109
  %v1111 = vpop.f32.mrb[0].mxu0
  %1112 = vmatprep.mubr.f32.mxu0 %v492
  %1113 = vmatmul.mubr.f32.gmra.mrb[0].mxu0 %v491
  %v1114 = vpop.f32.mrb[0].mxu0
  %v1115 = vadd.f32 %v1016, %v1114
  %v1116 = vpop.f32.mrb[0].mxu0
  %1117 = vmatprep.mubr.f32.mxu0 %v498
  %1118 = vmatmul.mubr.f32.gmra.mrb[0].mxu0 %v497
  %v1119 = vpop.f32.mrb[0].mxu0
  %v1120 = vadd.f32 %v1016, %v1119
  %v1121 = vpop.f32.mrb[0].mxu0
  %1122 = vdwg.mxu0
  %v1123 = vsel %vm647, %v1085, -inf
  %1124 = vmax.xlane.f32.xlu0 %v1123
  %v1125 = vpop.xlane.xlu0 %1124
  %v1126 = vsel %vm647, %v1090, -inf
  %1127 = vmax.xlane.f32.xlu0 %v1126
  %v1128 = vpop.xlane.xlu0 %1127
  %v1129 = vsel %vm647, %v1095, -inf
  %1130 = vmax.xlane.f32.xlu0 %v1129
  %v1131 = vpop.xlane.xlu0 %1130
  %v1132 = vsel %vm647, %v1100, -inf
  %1133 = vmax.xlane.f32.xlu0 %v1132
  %v1134 = vpop.xlane.xlu0 %1133
  %v1135 = vsel %vm647, %v1105, -inf
  %1136 = vmax.xlane.f32.xlu0 %v1135
  %v1137 = vpop.xlane.xlu0 %1136
  %v1138 = vsel %vm647, %v1110, -inf
  %1139 = vmax.xlane.f32.xlu0 %v1138
  %v1140 = vpop.xlane.xlu0 %1139
  %v1141 = vsel %vm647, %v1115, -inf
  %1142 = vmax.xlane.f32.xlu0 %v1141
  %v1143 = vpop.xlane.xlu0 %1142
  %v1144 = vsel %vm647, %v1120, -inf
  %1145 = vmax.xlane.f32.xlu0 %v1144
  %v1146 = vpop.xlane.xlu0 %1145
  %v1147 = vsub.f32 %v1085, %v1125
  %v1148 = vsub.f32 %v1090, %v1128
  %v1149 = vsub.f32 %v1095, %v1131
  %v1150 = vsub.f32 %v1100, %v1134
  %v1151 = vsub.f32 %v1105, %v1137
  %v1152 = vsub.f32 %v1110, %v1140
  %v1153 = vsub.f32 %v1115, %v1143
  %v1154 = vsub.f32 %v1120, %v1146
  %v1155 = vmul.f32 %v1147, 1.442695
  %v1156 = vpow.pop %v1155
  %v1157 = vmul.f32 %v1148, 1.442695
  %v1158 = vpow.pop %v1157
  %v1159 = vmul.f32 %v1149, 1.442695
  %v1160 = vpow.pop %v1159
  %v1161 = vmul.f32 %v1150, 1.442695
  %v1162 = vpow.pop %v1161
  %v1163 = vmul.f32 %v1151, 1.442695
  %v1164 = vpow.pop %v1163
  %v1165 = vmul.f32 %v1152, 1.442695
  %v1166 = vpow.pop %v1165
  %v1167 = vmul.f32 %v1153, 1.442695
  %v1168 = vpow.pop %v1167
  %v1169 = vmul.f32 %v1154, 1.442695
  %v1170 = vpow.pop %v1169
  %v1171 = vsel %vm647, %v1156, 0.0
  %1172 = vadd.xlane.f32.xlu0 %v1171
  %v1173 = vpop.xlane.xlu0 %1172
  %v1174 = vsel %vm647, %v1158, 0.0
  %1175 = vadd.xlane.f32.xlu0 %v1174
  %v1176 = vpop.xlane.xlu0 %1175
  %v1177 = vsel %vm647, %v1160, 0.0
  %1178 = vadd.xlane.f32.xlu0 %v1177
  %v1179 = vpop.xlane.xlu0 %1178
  %v1180 = vsel %vm647, %v1162, 0.0
  %1181 = vadd.xlane.f32.xlu0 %v1180
  %v1182 = vpop.xlane.xlu0 %1181
  %v1183 = vsel %vm647, %v1164, 0.0
  %1184 = vadd.xlane.f32.xlu0 %v1183
  %v1185 = vpop.xlane.xlu0 %1184
  %v1186 = vsel %vm647, %v1166, 0.0
  %1187 = vadd.xlane.f32.xlu0 %v1186
  %v1188 = vpop.xlane.xlu0 %1187
  %v1189 = vsel %vm647, %v1168, 0.0
  %1190 = vadd.xlane.f32.xlu0 %v1189
  %v1191 = vpop.xlane.xlu0 %1190
  %v1192 = vsel %vm647, %v1170, 0.0
  %1193 = vadd.xlane.f32.xlu0 %v1192
  %v1194 = vpop.xlane.xlu0 %1193
  %v1195 = vlog2.pop %v1173
  %v1196 = vmul.f32 %v1195, 0.6931472
  %v1197 = vlog2.pop %v1176
  %v1198 = vmul.f32 %v1197, 0.6931472
  %v1199 = vlog2.pop %v1179
  %v1200 = vmul.f32 %v1199, 0.6931472
  %v1201 = vlog2.pop %v1182
  %v1202 = vmul.f32 %v1201, 0.6931472
  %v1203 = vlog2.pop %v1185
  %v1204 = vmul.f32 %v1203, 0.6931472
  %v1205 = vlog2.pop %v1188
  %v1206 = vmul.f32 %v1205, 0.6931472
  %v1207 = vlog2.pop %v1191
  %v1208 = vmul.f32 %v1207, 0.6931472
  %v1209 = vlog2.pop %v1194
  %v1210 = vmul.f32 %v1209, 0.6931472
  %v1211 = vadd.f32 %v1125, %v1196
  %v1212 = vadd.f32 %v1128, %v1198
  %v1213 = vadd.f32 %v1131, %v1200
  %v1214 = vadd.f32 %v1134, %v1202
  %v1215 = vadd.f32 %v1137, %v1204
  %v1216 = vadd.f32 %v1140, %v1206
  %v1217 = vadd.f32 %v1143, %v1208
  %v1218 = vadd.f32 %v1146, %v1210
  %v1219 = vld [vmem:[%s5] sm:$0xff]
  %v1220 = vld [vmem:[%s5 + $0x8] sm:$0xff]
  %v1221 = vld [vmem:[%s5 + $0x10] sm:$0xff]
  %v1222 = vld [vmem:[%s5 + $0x18] sm:$0xff]
  %v1223 = vld [vmem:[%s5 + $0x20] sm:$0xff]
  %v1224 = vld [vmem:[%s5 + $0x28] sm:$0xff]
  %v1225 = vld [vmem:[%s5 + $0x30] sm:$0xff]
  %v1226 = vld [vmem:[%s5 + $0x38] sm:$0xff]
  %1227 = vset.pattern.permute.xlu0 1
  %1228 = vperm.xlu0 %1227, %v1219
  %v1229 = vpop.permute.xlu0 %1228
  %1230 = vset.pattern.permute.xlu0 1
  %1231 = vperm.xlu0 %1230, %v1220
  %v1232 = vpop.permute.xlu0 %1231
  %1233 = vset.pattern.permute.xlu0 1
  %1234 = vperm.xlu0 %1233, %v1221
  %v1235 = vpop.permute.xlu0 %1234
  %1236 = vset.pattern.permute.xlu0 1
  %1237 = vperm.xlu0 %1236, %v1222
  %v1238 = vpop.permute.xlu0 %1237
  %1239 = vset.pattern.permute.xlu0 1
  %1240 = vperm.xlu0 %1239, %v1223
  %v1241 = vpop.permute.xlu0 %1240
  %1242 = vset.pattern.permute.xlu0 1
  %1243 = vperm.xlu0 %1242, %v1224
  %v1244 = vpop.permute.xlu0 %1243
  %1245 = vset.pattern.permute.xlu0 1
  %1246 = vperm.xlu0 %1245, %v1225
  %v1247 = vpop.permute.xlu0 %1246
  %1248 = vset.pattern.permute.xlu0 1
  %1249 = vperm.xlu0 %1248, %v1226
  %v1250 = vpop.permute.xlu0 %1249
  %vm1251 = vcmp.eq.s32.totalorder %v502, %v1229
  %vm1252 = vcmp.eq.s32.totalorder %v502, %v1232
  %vm1253 = vcmp.eq.s32.totalorder %v502, %v1235
  %vm1254 = vcmp.eq.s32.totalorder %v502, %v1238
  %vm1255 = vcmp.eq.s32.totalorder %v502, %v1241
  %vm1256 = vcmp.eq.s32.totalorder %v502, %v1244
  %vm1257 = vcmp.eq.s32.totalorder %v502, %v1247
  %vm1258 = vcmp.eq.s32.totalorder %v502, %v1250
  %v1259 = vsel %vm1251, %v1085, 0.0
  %v1260 = vsel %vm1252, %v1090, 0.0
  %v1261 = vsel %vm1253, %v1095, 0.0
  %v1262 = vsel %vm1254, %v1100, 0.0
  %v1263 = vsel %vm1255, %v1105, 0.0
  %v1264 = vsel %vm1256, %v1110, 0.0
  %v1265 = vsel %vm1257, %v1115, 0.0
  %v1266 = vsel %vm1258, %v1120, 0.0
  %v1267 = vsel %vm647, %v1259, 0.0
  %1268 = vadd.xlane.f32.xlu0 %v1267
  %v1269 = vpop.xlane.xlu0 %1268
  %v1270 = vsel %vm647, %v1260, 0.0
  %1271 = vadd.xlane.f32.xlu0 %v1270
  %v1272 = vpop.xlane.xlu0 %1271
  %v1273 = vsel %vm647, %v1261, 0.0
  %1274 = vadd.xlane.f32.xlu0 %v1273
  %v1275 = vpop.xlane.xlu0 %1274
  %v1276 = vsel %vm647, %v1262, 0.0
  %1277 = vadd.xlane.f32.xlu0 %v1276
  %v1278 = vpop.xlane.xlu0 %1277
  %v1279 = vsel %vm647, %v1263, 0.0
  %1280 = vadd.xlane.f32.xlu0 %v1279
  %v1281 = vpop.xlane.xlu0 %1280
  %v1282 = vsel %vm647, %v1264, 0.0
  %1283 = vadd.xlane.f32.xlu0 %v1282
  %v1284 = vpop.xlane.xlu0 %1283
  %v1285 = vsel %vm647, %v1265, 0.0
  %1286 = vadd.xlane.f32.xlu0 %v1285
  %v1287 = vpop.xlane.xlu0 %1286
  %v1288 = vsel %vm647, %v1266, 0.0
  %1289 = vadd.xlane.f32.xlu0 %v1288
  %v1290 = vpop.xlane.xlu0 %1289
  %vm1291 = vcmp.eq.f32.partialorder %v1085, %v1125
  %vm1292 = vcmp.eq.f32.partialorder %v1090, %v1128
  %vm1293 = vcmp.eq.f32.partialorder %v1095, %v1131
  %vm1294 = vcmp.eq.f32.partialorder %v1100, %v1134
  %vm1295 = vcmp.eq.f32.partialorder %v1105, %v1137
  %vm1296 = vcmp.eq.f32.partialorder %v1110, %v1140
  %vm1297 = vcmp.eq.f32.partialorder %v1115, %v1143
  %vm1298 = vcmp.eq.f32.partialorder %v1120, %v1146
  %v1299 = vsel %vm1291, %v502, 2
  %v1300 = vsel %vm1292, %v502, 2
  %v1301 = vsel %vm1293, %v502, 2
  %v1302 = vsel %vm1294, %v502, 2
  %v1303 = vsel %vm1295, %v502, 2
  %v1304 = vsel %vm1296, %v502, 2
  %v1305 = vsel %vm1297, %v502, 2
  %v1306 = vsel %vm1298, %v502, 2
  %v1307 = vsel %vm647, %v1299, 2147483647
  %v1308 = vand.u32 %v1307, 65535
  %v1309 = vshra.s32 %v1307, 16
  %v1310 = vcvt.s32.f32 %v1308
  %v1311 = vcvt.s32.f32 %v1309
  %1312 = vmin.xlane.f32.xlu0 %v1311
  %v1313 = vpop.xlane.xlu0 %1312
  %vm1314 = vcmp.eq.f32.partialorder %v1311, %v1313
  %v1315 = vsel %vm1314, %v1310, inf
  %1316 = vmin.xlane.f32.xlu0 %v1315
  %v1317 = vpop.xlane.xlu0 %1316
  %v1318 = vcvt.f32.s32 %v1317
  %v1319 = vcvt.f32.s32 %v1313
  %v1320 = vshll.u32 %v1319, 16
  %v1321 = vadd.s32 %v1320, %v1318
  %v1322 = vsel %vm647, %v1300, 2147483647
  %v1323 = vand.u32 %v1322, 65535
  %v1324 = vshra.s32 %v1322, 16
  %v1325 = vcvt.s32.f32 %v1323
  %v1326 = vcvt.s32.f32 %v1324
  %1327 = vmin.xlane.f32.xlu0 %v1326
  %v1328 = vpop.xlane.xlu0 %1327
  %vm1329 = vcmp.eq.f32.partialorder %v1326, %v1328
  %v1330 = vsel %vm1329, %v1325, inf
  %1331 = vmin.xlane.f32.xlu0 %v1330
  %v1332 = vpop.xlane.xlu0 %1331
  %v1333 = vcvt.f32.s32 %v1332
  %v1334 = vcvt.f32.s32 %v1328
  %v1335 = vshll.u32 %v1334, 16
  %v1336 = vadd.s32 %v1335, %v1333
  %v1337 = vsel %vm647, %v1301, 2147483647
  %v1338 = vand.u32 %v1337, 65535
  %v1339 = vshra.s32 %v1337, 16
  %v1340 = vcvt.s32.f32 %v1338
  %v1341 = vcvt.s32.f32 %v1339
  %1342 = vmin.xlane.f32.xlu0 %v1341
  %v1343 = vpop.xlane.xlu0 %1342
  %vm1344 = vcmp.eq.f32.partialorder %v1341, %v1343
  %v1345 = vsel %vm1344, %v1340, inf
  %1346 = vmin.xlane.f32.xlu0 %v1345
  %v1347 = vpop.xlane.xlu0 %1346
  %v1348 = vcvt.f32.s32 %v1347
  %v1349 = vcvt.f32.s32 %v1343
  %v1350 = vshll.u32 %v1349, 16
  %v1351 = vadd.s32 %v1350, %v1348
  %v1352 = vsel %vm647, %v1302, 2147483647
  %v1353 = vand.u32 %v1352, 65535
  %v1354 = vshra.s32 %v1352, 16
  %v1355 = vcvt.s32.f32 %v1353
  %v1356 = vcvt.s32.f32 %v1354
  %1357 = vmin.xlane.f32.xlu0 %v1356
  %v1358 = vpop.xlane.xlu0 %1357
  %vm1359 = vcmp.eq.f32.partialorder %v1356, %v1358
  %v1360 = vsel %vm1359, %v1355, inf
  %1361 = vmin.xlane.f32.xlu0 %v1360
  %v1362 = vpop.xlane.xlu0 %1361
  %v1363 = vcvt.f32.s32 %v1362
  %v1364 = vcvt.f32.s32 %v1358
  %v1365 = vshll.u32 %v1364, 16
  %v1366 = vadd.s32 %v1365, %v1363
  %v1367 = vsel %vm647, %v1303, 2147483647
  %v1368 = vand.u32 %v1367, 65535
  %v1369 = vshra.s32 %v1367, 16
  %v1370 = vcvt.s32.f32 %v1368
  %v1371 = vcvt.s32.f32 %v1369
  %1372 = vmin.xlane.f32.xlu0 %v1371
  %v1373 = vpop.xlane.xlu0 %1372
  %vm1374 = vcmp.eq.f32.partialorder %v1371, %v1373
  %v1375 = vsel %vm1374, %v1370, inf
  %1376 = vmin.xlane.f32.xlu0 %v1375
  %v1377 = vpop.xlane.xlu0 %1376
  %v1378 = vcvt.f32.s32 %v1377
  %v1379 = vcvt.f32.s32 %v1373
  %v1380 = vshll.u32 %v1379, 16
  %v1381 = vadd.s32 %v1380, %v1378
  %v1382 = vsel %vm647, %v1304, 2147483647
  %v1383 = vand.u32 %v1382, 65535
  %v1384 = vshra.s32 %v1382, 16
  %v1385 = vcvt.s32.f32 %v1383
  %v1386 = vcvt.s32.f32 %v1384
  %1387 = vmin.xlane.f32.xlu0 %v1386
  %v1388 = vpop.xlane.xlu0 %1387
  %vm1389 = vcmp.eq.f32.partialorder %v1386, %v1388
  %v1390 = vsel %vm1389, %v1385, inf
  %1391 = vmin.xlane.f32.xlu0 %v1390
  %v1392 = vpop.xlane.xlu0 %1391
  %v1393 = vcvt.f32.s32 %v1392
  %v1394 = vcvt.f32.s32 %v1388
  %v1395 = vshll.u32 %v1394, 16
  %v1396 = vadd.s32 %v1395, %v1393
  %v1397 = vsel %vm647, %v1305, 2147483647
  %v1398 = vand.u32 %v1397, 65535
  %v1399 = vshra.s32 %v1397, 16
  %v1400 = vcvt.s32.f32 %v1398
  %v1401 = vcvt.s32.f32 %v1399
  %1402 = vmin.xlane.f32.xlu0 %v1401
  %v1403 = vpop.xlane.xlu0 %1402
  %vm1404 = vcmp.eq.f32.partialorder %v1401, %v1403
  %v1405 = vsel %vm1404, %v1400, inf
  %1406 = vmin.xlane.f32.xlu0 %v1405
  %v1407 = vpop.xlane.xlu0 %1406
  %v1408 = vcvt.f32.s32 %v1407
  %v1409 = vcvt.f32.s32 %v1403
  %v1410 = vshll.u32 %v1409, 16
  %v1411 = vadd.s32 %v1410, %v1408
  %v1412 = vsel %vm647, %v1306, 2147483647
  %v1413 = vand.u32 %v1412, 65535
  %v1414 = vshra.s32 %v1412, 16
  %v1415 = vcvt.s32.f32 %v1413
  %v1416 = vcvt.s32.f32 %v1414
  %1417 = vmin.xlane.f32.xlu0 %v1416
  %v1418 = vpop.xlane.xlu0 %1417
  %vm1419 = vcmp.eq.f32.partialorder %v1416, %v1418
  %v1420 = vsel %vm1419, %v1415, inf
  %1421 = vmin.xlane.f32.xlu0 %v1420
  %v1422 = vpop.xlane.xlu0 %1421
  %v1423 = vcvt.f32.s32 %v1422
  %v1424 = vcvt.f32.s32 %v1418
  %v1425 = vshll.u32 %v1424, 16
  %v1426 = vadd.s32 %v1425, %v1423
  %vm1427 = vcmask 15368
  %1428 = vst.msk [vmem:[%s6] sm:$0xff] %vm1427, %v1321
  %1429 = vst.msk [vmem:[%s6 + $0x8] sm:$0xff] %vm1427, %v1336
  %1430 = vst.msk [vmem:[%s6 + $0x10] sm:$0xff] %vm1427, %v1351
  %1431 = vst.msk [vmem:[%s6 + $0x18] sm:$0xff] %vm1427, %v1366
  %1432 = vst.msk [vmem:[%s6 + $0x20] sm:$0xff] %vm1427, %v1381
  %1433 = vst.msk [vmem:[%s6 + $0x28] sm:$0xff] %vm1427, %v1396
  %1434 = vst.msk [vmem:[%s6 + $0x30] sm:$0xff] %vm1427, %v1411
  %1435 = vst.msk [vmem:[%s6 + $0x38] sm:$0xff] %vm1427, %v1426
  %v1436 = vsub.f32 %v1211, %v1269
  %v1437 = vsub.f32 %v1212, %v1272
  %v1438 = vsub.f32 %v1213, %v1275
  %v1439 = vsub.f32 %v1214, %v1278
  %v1440 = vsub.f32 %v1215, %v1281
  %v1441 = vsub.f32 %v1216, %v1284
  %v1442 = vsub.f32 %v1217, %v1287
  %v1443 = vsub.f32 %v1218, %v1290
  %1444 = vst.msk [vmem:[%s7] sm:$0xff] %vm1427, %v1436
  %1445 = vst.msk [vmem:[%s7 + $0x8] sm:$0xff] %vm1427, %v1437
  %1446 = vst.msk [vmem:[%s7 + $0x10] sm:$0xff] %vm1427, %v1438
  %1447 = vst.msk [vmem:[%s7 + $0x18] sm:$0xff] %vm1427, %v1439
  %1448 = vst.msk [vmem:[%s7 + $0x20] sm:$0xff] %vm1427, %v1440
  %1449 = vst.msk [vmem:[%s7 + $0x28] sm:$0xff] %vm1427, %v1441
  %1450 = vst.msk [vmem:[%s7 + $0x30] sm:$0xff] %vm1427, %v1442
  %1451 = vst.msk [vmem:[%s7 + $0x38] sm:$0xff] %vm1427, %v1443
  %s1452 = scalar_lea.vmem %s3, 512
  %v1453 = vld [vmem:[%s1452] sm:$0xff]
  %v1454 = vld [vmem:[%s1452 + $0x8] sm:$0xff]
  %v1455 = vld [vmem:[%s1452 + $0x10] sm:$0xff]
  %v1456 = vld [vmem:[%s1452 + $0x18] sm:$0xff]
  %v1457 = vld [vmem:[%s1452 + $0x20] sm:$0xff]
  %v1458 = vld [vmem:[%s1452 + $0x28] sm:$0xff]
  %v1459 = vld [vmem:[%s1452 + $0x30] sm:$0xff]
  %v1460 = vld [vmem:[%s1452 + $0x38] sm:$0xff]
  %v1461 = vld [vmem:[%s1452 + $0x40] sm:$0xff]
  %v1462 = vld [vmem:[%s1452 + $0x48] sm:$0xff]
  %v1463 = vld [vmem:[%s1452 + $0x50] sm:$0xff]
  %v1464 = vld [vmem:[%s1452 + $0x58] sm:$0xff]
  %v1465 = vld [vmem:[%s1452 + $0x60] sm:$0xff]
  %v1466 = vld [vmem:[%s1452 + $0x68] sm:$0xff]
  %v1467 = vld [vmem:[%s1452 + $0x70] sm:$0xff]
  %v1468 = vld [vmem:[%s1452 + $0x78] sm:$0xff]
  %v1469 = vld [vmem:[%s1452 + $0x80] sm:$0xff]
  %v1470 = vld [vmem:[%s1452 + $0x88] sm:$0xff]
  %v1471 = vld [vmem:[%s1452 + $0x90] sm:$0xff]
  %v1472 = vld [vmem:[%s1452 + $0x98] sm:$0xff]
  %v1473 = vld [vmem:[%s1452 + $0xa0] sm:$0xff]
  %v1474 = vld [vmem:[%s1452 + $0xa8] sm:$0xff]
  %v1475 = vld [vmem:[%s1452 + $0xb0] sm:$0xff]
  %v1476 = vld [vmem:[%s1452 + $0xb8] sm:$0xff]
  %v1477 = vld [vmem:[%s1452 + $0xc0] sm:$0xff]
  %v1478 = vld [vmem:[%s1452 + $0xc8] sm:$0xff]
  %v1479 = vld [vmem:[%s1452 + $0xd0] sm:$0xff]
  %v1480 = vld [vmem:[%s1452 + $0xd8] sm:$0xff]
  %v1481 = vld [vmem:[%s1452 + $0xe0] sm:$0xff]
  %v1482 = vld [vmem:[%s1452 + $0xe8] sm:$0xff]
  %v1483 = vld [vmem:[%s1452 + $0xf0] sm:$0xff]
  %v1484 = vld [vmem:[%s1452 + $0xf8] sm:$0xff]
  %s1485 = scalar_lea.vmem %s4, 2
  %v1486 = vld [vmem:[%s1485] sm:$0x1]
  %v1488 = vlaneseq
  %v1489 = vshrl.u32 %v1488, 7
  %v1490 = vsub.s32 0, %v1489
  %v1491 = vrot.slane %v1486, %v1490
  %1493 = vmatprep.subr.mxu0 0.0
  %1494 = vmatpush1.msra.mxu0 %v1453
  %1495 = vmatprep.subr.mxu0 0.0
  %1496 = vmatpush1.msra.mxu0 %v1454
  %1497 = vmatprep.subr.mxu0 0.0
  %1498 = vmatpush1.msra.mxu0 %v1455
  %1499 = vmatprep.subr.mxu0 0.0
  %1500 = vmatpush1.msra.mxu0 %v1456
  %1501 = vmatprep.subr.mxu0 0.0
  %1502 = vmatpush1.msra.mxu0 %v1457
  %1503 = vmatprep.subr.mxu0 0.0
  %1504 = vmatpush1.msra.mxu0 %v1458
  %1505 = vmatprep.subr.mxu0 0.0
  %1506 = vmatpush1.msra.mxu0 %v1459
  %1507 = vmatprep.subr.mxu0 0.0
  %1508 = vmatpush1.msra.mxu0 %v1460
  %1509 = vmatprep.subr.mxu0 0.0
  %1510 = vmatpush1.msra.mxu0 %v1461
  %1511 = vmatprep.subr.mxu0 0.0
  %1512 = vmatpush1.msra.mxu0 %v1462
  %1513 = vmatprep.subr.mxu0 0.0
  %1514 = vmatpush1.msra.mxu0 %v1463
  %1515 = vmatprep.subr.mxu0 0.0
  %1516 = vmatpush1.msra.mxu0 %v1464
  %1517 = vmatprep.subr.mxu0 0.0
  %1518 = vmatpush1.msra.mxu0 %v1465
  %1519 = vmatprep.subr.mxu0 0.0
  %1520 = vmatpush1.msra.mxu0 %v1466
  %1521 = vmatprep.subr.mxu0 0.0
  %1522 = vmatpush1.msra.mxu0 %v1467
  %1523 = vmatprep.subr.mxu0 0.0
  %1524 = vmatpush1.msra.mxu0 %v1468
  %1525 = vmatprep.subr.mxu0 0.0
  %1526 = vmatpush1.msra.mxu0 %v1469
  %1527 = vmatprep.subr.mxu0 0.0
  %1528 = vmatpush1.msra.mxu0 %v1470
  %1529 = vmatprep.subr.mxu0 0.0
  %1530 = vmatpush1.msra.mxu0 %v1471
  %1531 = vmatprep.subr.mxu0 0.0
  %1532 = vmatpush1.msra.mxu0 %v1472
  %1533 = vmatprep.subr.mxu0 0.0
  %1534 = vmatpush1.msra.mxu0 %v1473
  %1535 = vmatprep.subr.mxu0 0.0
  %1536 = vmatpush1.msra.mxu0 %v1474
  %1537 = vmatprep.subr.mxu0 0.0
  %1538 = vmatpush1.msra.mxu0 %v1475
  %1539 = vmatprep.subr.mxu0 0.0
  %1540 = vmatpush1.msra.mxu0 %v1476
  %1541 = vmatprep.subr.mxu0 0.0
  %1542 = vmatpush1.msra.mxu0 %v1477
  %1543 = vmatprep.subr.mxu0 0.0
  %1544 = vmatpush1.msra.mxu0 %v1478
  %1545 = vmatprep.subr.mxu0 0.0
  %1546 = vmatpush1.msra.mxu0 %v1479
  %1547 = vmatprep.subr.mxu0 0.0
  %1548 = vmatpush1.msra.mxu0 %v1480
  %1549 = vmatprep.subr.mxu0 0.0
  %1550 = vmatpush1.msra.mxu0 %v1481
  %1551 = vmatprep.subr.mxu0 0.0
  %1552 = vmatpush1.msra.mxu0 %v1482
  %1553 = vmatprep.subr.mxu0 0.0
  %1554 = vmatpush1.msra.mxu0 %v1483
  %1555 = vmatprep.subr.mxu0 0.0
  %1556 = vmatpush1.msra.mxu0 %v1484
  %1557 = vmatprep.mubr.f32.mxu0 %v458
  %1558 = vmatmul.mubr.f32.gmra.mrb[0].mxu0 %v457
  %v1559 = vpop.f32.mrb[0].mxu0
  %v1560 = vadd.f32 %v1491, %v1559
  %v1561 = vpop.f32.mrb[0].mxu0
  %1562 = vmatprep.mubr.f32.mxu0 %v464
  %1563 = vmatmul.mubr.f32.gmra.mrb[0].mxu0 %v463
  %v1564 = vpop.f32.mrb[0].mxu0
  %v1565 = vadd.f32 %v1491, %v1564
  %v1566 = vpop.f32.mrb[0].mxu0
  %1567 = vmatprep.mubr.f32.mxu0 %v470
  %1568 = vmatmul.mubr.f32.gmra.mrb[0].mxu0 %v469
  %v1569 = vpop.f32.mrb[0].mxu0
  %v1570 = vadd.f32 %v1491, %v1569
  %v1571 = vpop.f32.mrb[0].mxu0
  %1572 = vmatprep.mubr.f32.mxu0 %v476
  %1573 = vmatmul.mubr.f32.gmra.mrb[0].mxu0 %v475
  %v1574 = vpop.f32.mrb[0].mxu0
  %v1575 = vadd.f32 %v1491, %v1574
  %v1576 = vpop.f32.mrb[0].mxu0
  %1577 = vmatprep.mubr.f32.mxu0 %v482
  %1578 = vmatmul.mubr.f32.gmra.mrb[0].mxu0 %v481
  %v1579 = vpop.f32.mrb[0].mxu0
  %v1580 = vadd.f32 %v1491, %v1579
  %v1581 = vpop.f32.mrb[0].mxu0
  %1582 = vmatprep.mubr.f32.mxu0 %v488
  %1583 = vmatmul.mubr.f32.gmra.mrb[0].mxu0 %v487
  %v1584 = vpop.f32.mrb[0].mxu0
  %v1585 = vadd.f32 %v1491, %v1584
  %v1586 = vpop.f32.mrb[0].mxu0
  %1587 = vmatprep.mubr.f32.mxu0 %v494
  %1588 = vmatmul.mubr.f32.gmra.mrb[0].mxu0 %v493
  %v1589 = vpop.f32.mrb[0].mxu0
  %v1590 = vadd.f32 %v1491, %v1589
  %v1591 = vpop.f32.mrb[0].mxu0
  %1592 = vmatprep.mubr.f32.mxu0 %v500
  %1593 = vmatmul.mubr.f32.gmra.mrb[0].mxu0 %v499
  %v1594 = vpop.f32.mrb[0].mxu0
  %v1595 = vadd.f32 %v1491, %v1594
  %v1596 = vpop.f32.mrb[0].mxu0
  %1597 = vdwg.mxu0
  %v1598 = vsel %vm647, %v1560, -inf
  %1599 = vmax.xlane.f32.xlu0 %v1598
  %v1600 = vpop.xlane.xlu0 %1599
  %v1601 = vsel %vm647, %v1565, -inf
  %1602 = vmax.xlane.f32.xlu0 %v1601
  %v1603 = vpop.xlane.xlu0 %1602
  %v1604 = vsel %vm647, %v1570, -inf
  %1605 = vmax.xlane.f32.xlu0 %v1604
  %v1606 = vpop.xlane.xlu0 %1605
  %v1607 = vsel %vm647, %v1575, -inf
  %1608 = vmax.xlane.f32.xlu0 %v1607
  %v1609 = vpop.xlane.xlu0 %1608
  %v1610 = vsel %vm647, %v1580, -inf
  %1611 = vmax.xlane.f32.xlu0 %v1610
  %v1612 = vpop.xlane.xlu0 %1611
  %v1613 = vsel %vm647, %v1585, -inf
  %1614 = vmax.xlane.f32.xlu0 %v1613
  %v1615 = vpop.xlane.xlu0 %1614
  %v1616 = vsel %vm647, %v1590, -inf
  %1617 = vmax.xlane.f32.xlu0 %v1616
  %v1618 = vpop.xlane.xlu0 %1617
  %v1619 = vsel %vm647, %v1595, -inf
  %1620 = vmax.xlane.f32.xlu0 %v1619
  %v1621 = vpop.xlane.xlu0 %1620
  %v1622 = vsub.f32 %v1560, %v1600
  %v1623 = vsub.f32 %v1565, %v1603
  %v1624 = vsub.f32 %v1570, %v1606
  %v1625 = vsub.f32 %v1575, %v1609
  %v1626 = vsub.f32 %v1580, %v1612
  %v1627 = vsub.f32 %v1585, %v1615
  %v1628 = vsub.f32 %v1590, %v1618
  %v1629 = vsub.f32 %v1595, %v1621
  %v1630 = vmul.f32 %v1622, 1.442695
  %v1631 = vpow.pop %v1630
  %v1632 = vmul.f32 %v1623, 1.442695
  %v1633 = vpow.pop %v1632
  %v1634 = vmul.f32 %v1624, 1.442695
  %v1635 = vpow.pop %v1634
  %v1636 = vmul.f32 %v1625, 1.442695
  %v1637 = vpow.pop %v1636
  %v1638 = vmul.f32 %v1626, 1.442695
  %v1639 = vpow.pop %v1638
  %v1640 = vmul.f32 %v1627, 1.442695
  %v1641 = vpow.pop %v1640
  %v1642 = vmul.f32 %v1628, 1.442695
  %v1643 = vpow.pop %v1642
  %v1644 = vmul.f32 %v1629, 1.442695
  %v1645 = vpow.pop %v1644
  %v1646 = vsel %vm647, %v1631, 0.0
  %1647 = vadd.xlane.f32.xlu0 %v1646
  %v1648 = vpop.xlane.xlu0 %1647
  %v1649 = vsel %vm647, %v1633, 0.0
  %1650 = vadd.xlane.f32.xlu0 %v1649
  %v1651 = vpop.xlane.xlu0 %1650
  %v1652 = vsel %vm647, %v1635, 0.0
  %1653 = vadd.xlane.f32.xlu0 %v1652
  %v1654 = vpop.xlane.xlu0 %1653
  %v1655 = vsel %vm647, %v1637, 0.0
  %1656 = vadd.xlane.f32.xlu0 %v1655
  %v1657 = vpop.xlane.xlu0 %1656
  %v1658 = vsel %vm647, %v1639, 0.0
  %1659 = vadd.xlane.f32.xlu0 %v1658
  %v1660 = vpop.xlane.xlu0 %1659
  %v1661 = vsel %vm647, %v1641, 0.0
  %1662 = vadd.xlane.f32.xlu0 %v1661
  %v1663 = vpop.xlane.xlu0 %1662
  %v1664 = vsel %vm647, %v1643, 0.0
  %1665 = vadd.xlane.f32.xlu0 %v1664
  %v1666 = vpop.xlane.xlu0 %1665
  %v1667 = vsel %vm647, %v1645, 0.0
  %1668 = vadd.xlane.f32.xlu0 %v1667
  %v1669 = vpop.xlane.xlu0 %1668
  %v1670 = vlog2.pop %v1648
  %v1671 = vmul.f32 %v1670, 0.6931472
  %v1672 = vlog2.pop %v1651
  %v1673 = vmul.f32 %v1672, 0.6931472
  %v1674 = vlog2.pop %v1654
  %v1675 = vmul.f32 %v1674, 0.6931472
  %v1676 = vlog2.pop %v1657
  %v1677 = vmul.f32 %v1676, 0.6931472
  %v1678 = vlog2.pop %v1660
  %v1679 = vmul.f32 %v1678, 0.6931472
  %v1680 = vlog2.pop %v1663
  %v1681 = vmul.f32 %v1680, 0.6931472
  %v1682 = vlog2.pop %v1666
  %v1683 = vmul.f32 %v1682, 0.6931472
  %v1684 = vlog2.pop %v1669
  %v1685 = vmul.f32 %v1684, 0.6931472
  %v1686 = vadd.f32 %v1600, %v1671
  %v1687 = vadd.f32 %v1603, %v1673
  %v1688 = vadd.f32 %v1606, %v1675
  %v1689 = vadd.f32 %v1609, %v1677
  %v1690 = vadd.f32 %v1612, %v1679
  %v1691 = vadd.f32 %v1615, %v1681
  %v1692 = vadd.f32 %v1618, %v1683
  %v1693 = vadd.f32 %v1621, %v1685
  %v1694 = vld [vmem:[%s5] sm:$0xff]
  %v1695 = vld [vmem:[%s5 + $0x8] sm:$0xff]
  %v1696 = vld [vmem:[%s5 + $0x10] sm:$0xff]
  %v1697 = vld [vmem:[%s5 + $0x18] sm:$0xff]
  %v1698 = vld [vmem:[%s5 + $0x20] sm:$0xff]
  %v1699 = vld [vmem:[%s5 + $0x28] sm:$0xff]
  %v1700 = vld [vmem:[%s5 + $0x30] sm:$0xff]
  %v1701 = vld [vmem:[%s5 + $0x38] sm:$0xff]
  %1702 = vset.pattern.permute.xlu0 2
  %1703 = vperm.xlu0 %1702, %v1694
  %v1704 = vpop.permute.xlu0 %1703
  %1705 = vset.pattern.permute.xlu0 2
  %1706 = vperm.xlu0 %1705, %v1695
  %v1707 = vpop.permute.xlu0 %1706
  %1708 = vset.pattern.permute.xlu0 2
  %1709 = vperm.xlu0 %1708, %v1696
  %v1710 = vpop.permute.xlu0 %1709
  %1711 = vset.pattern.permute.xlu0 2
  %1712 = vperm.xlu0 %1711, %v1697
  %v1713 = vpop.permute.xlu0 %1712
  %1714 = vset.pattern.permute.xlu0 2
  %1715 = vperm.xlu0 %1714, %v1698
  %v1716 = vpop.permute.xlu0 %1715
  %1717 = vset.pattern.permute.xlu0 2
  %1718 = vperm.xlu0 %1717, %v1699
  %v1719 = vpop.permute.xlu0 %1718
  %1720 = vset.pattern.permute.xlu0 2
  %1721 = vperm.xlu0 %1720, %v1700
  %v1722 = vpop.permute.xlu0 %1721
  %1723 = vset.pattern.permute.xlu0 2
  %1724 = vperm.xlu0 %1723, %v1701
  %v1725 = vpop.permute.xlu0 %1724
  %vm1726 = vcmp.eq.s32.totalorder %v502, %v1704
  %vm1727 = vcmp.eq.s32.totalorder %v502, %v1707
  %vm1728 = vcmp.eq.s32.totalorder %v502, %v1710
  %vm1729 = vcmp.eq.s32.totalorder %v502, %v1713
  %vm1730 = vcmp.eq.s32.totalorder %v502, %v1716
  %vm1731 = vcmp.eq.s32.totalorder %v502, %v1719
  %vm1732 = vcmp.eq.s32.totalorder %v502, %v1722
  %vm1733 = vcmp.eq.s32.totalorder %v502, %v1725
  %v1734 = vsel %vm1726, %v1560, 0.0
  %v1735 = vsel %vm1727, %v1565, 0.0
  %v1736 = vsel %vm1728, %v1570, 0.0
  %v1737 = vsel %vm1729, %v1575, 0.0
  %v1738 = vsel %vm1730, %v1580, 0.0
  %v1739 = vsel %vm1731, %v1585, 0.0
  %v1740 = vsel %vm1732, %v1590, 0.0
  %v1741 = vsel %vm1733, %v1595, 0.0
  %v1742 = vsel %vm647, %v1734, 0.0
  %1743 = vadd.xlane.f32.xlu0 %v1742
  %v1744 = vpop.xlane.xlu0 %1743
  %v1745 = vsel %vm647, %v1735, 0.0
  %1746 = vadd.xlane.f32.xlu0 %v1745
  %v1747 = vpop.xlane.xlu0 %1746
  %v1748 = vsel %vm647, %v1736, 0.0
  %1749 = vadd.xlane.f32.xlu0 %v1748
  %v1750 = vpop.xlane.xlu0 %1749
  %v1751 = vsel %vm647, %v1737, 0.0
  %1752 = vadd.xlane.f32.xlu0 %v1751
  %v1753 = vpop.xlane.xlu0 %1752
  %v1754 = vsel %vm647, %v1738, 0.0
  %1755 = vadd.xlane.f32.xlu0 %v1754
  %v1756 = vpop.xlane.xlu0 %1755
  %v1757 = vsel %vm647, %v1739, 0.0
  %1758 = vadd.xlane.f32.xlu0 %v1757
  %v1759 = vpop.xlane.xlu0 %1758
  %v1760 = vsel %vm647, %v1740, 0.0
  %1761 = vadd.xlane.f32.xlu0 %v1760
  %v1762 = vpop.xlane.xlu0 %1761
  %v1763 = vsel %vm647, %v1741, 0.0
  %1764 = vadd.xlane.f32.xlu0 %v1763
  %v1765 = vpop.xlane.xlu0 %1764
  %vm1766 = vcmp.eq.f32.partialorder %v1560, %v1600
  %vm1767 = vcmp.eq.f32.partialorder %v1565, %v1603
  %vm1768 = vcmp.eq.f32.partialorder %v1570, %v1606
  %vm1769 = vcmp.eq.f32.partialorder %v1575, %v1609
  %vm1770 = vcmp.eq.f32.partialorder %v1580, %v1612
  %vm1771 = vcmp.eq.f32.partialorder %v1585, %v1615
  %vm1772 = vcmp.eq.f32.partialorder %v1590, %v1618
  %vm1773 = vcmp.eq.f32.partialorder %v1595, %v1621
  %v1774 = vsel %vm1766, %v502, 2
  %v1775 = vsel %vm1767, %v502, 2
  %v1776 = vsel %vm1768, %v502, 2
  %v1777 = vsel %vm1769, %v502, 2
  %v1778 = vsel %vm1770, %v502, 2
  %v1779 = vsel %vm1771, %v502, 2
  %v1780 = vsel %vm1772, %v502, 2
  %v1781 = vsel %vm1773, %v502, 2
  %v1782 = vsel %vm647, %v1774, 2147483647
  %v1783 = vand.u32 %v1782, 65535
  %v1784 = vshra.s32 %v1782, 16
  %v1785 = vcvt.s32.f32 %v1783
  %v1786 = vcvt.s32.f32 %v1784
  %1787 = vmin.xlane.f32.xlu0 %v1786
  %v1788 = vpop.xlane.xlu0 %1787
  %vm1789 = vcmp.eq.f32.partialorder %v1786, %v1788
  %v1790 = vsel %vm1789, %v1785, inf
  %1791 = vmin.xlane.f32.xlu0 %v1790
  %v1792 = vpop.xlane.xlu0 %1791
  %v1793 = vcvt.f32.s32 %v1792
  %v1794 = vcvt.f32.s32 %v1788
  %v1795 = vshll.u32 %v1794, 16
  %v1796 = vadd.s32 %v1795, %v1793
  %v1797 = vsel %vm647, %v1775, 2147483647
  %v1798 = vand.u32 %v1797, 65535
  %v1799 = vshra.s32 %v1797, 16
  %v1800 = vcvt.s32.f32 %v1798
  %v1801 = vcvt.s32.f32 %v1799
  %1802 = vmin.xlane.f32.xlu0 %v1801
  %v1803 = vpop.xlane.xlu0 %1802
  %vm1804 = vcmp.eq.f32.partialorder %v1801, %v1803
  %v1805 = vsel %vm1804, %v1800, inf
  %1806 = vmin.xlane.f32.xlu0 %v1805
  %v1807 = vpop.xlane.xlu0 %1806
  %v1808 = vcvt.f32.s32 %v1807
  %v1809 = vcvt.f32.s32 %v1803
  %v1810 = vshll.u32 %v1809, 16
  %v1811 = vadd.s32 %v1810, %v1808
  %v1812 = vsel %vm647, %v1776, 2147483647
  %v1813 = vand.u32 %v1812, 65535
  %v1814 = vshra.s32 %v1812, 16
  %v1815 = vcvt.s32.f32 %v1813
  %v1816 = vcvt.s32.f32 %v1814
  %1817 = vmin.xlane.f32.xlu0 %v1816
  %v1818 = vpop.xlane.xlu0 %1817
  %vm1819 = vcmp.eq.f32.partialorder %v1816, %v1818
  %v1820 = vsel %vm1819, %v1815, inf
  %1821 = vmin.xlane.f32.xlu0 %v1820
  %v1822 = vpop.xlane.xlu0 %1821
  %v1823 = vcvt.f32.s32 %v1822
  %v1824 = vcvt.f32.s32 %v1818
  %v1825 = vshll.u32 %v1824, 16
  %v1826 = vadd.s32 %v1825, %v1823
  %v1827 = vsel %vm647, %v1777, 2147483647
  %v1828 = vand.u32 %v1827, 65535
  %v1829 = vshra.s32 %v1827, 16
  %v1830 = vcvt.s32.f32 %v1828
  %v1831 = vcvt.s32.f32 %v1829
  %1832 = vmin.xlane.f32.xlu0 %v1831
  %v1833 = vpop.xlane.xlu0 %1832
  %vm1834 = vcmp.eq.f32.partialorder %v1831, %v1833
  %v1835 = vsel %vm1834, %v1830, inf
  %1836 = vmin.xlane.f32.xlu0 %v1835
  %v1837 = vpop.xlane.xlu0 %1836
  %v1838 = vcvt.f32.s32 %v1837
  %v1839 = vcvt.f32.s32 %v1833
  %v1840 = vshll.u32 %v1839, 16
  %v1841 = vadd.s32 %v1840, %v1838
  %v1842 = vsel %vm647, %v1778, 2147483647
  %v1843 = vand.u32 %v1842, 65535
  %v1844 = vshra.s32 %v1842, 16
  %v1845 = vcvt.s32.f32 %v1843
  %v1846 = vcvt.s32.f32 %v1844
  %1847 = vmin.xlane.f32.xlu0 %v1846
  %v1848 = vpop.xlane.xlu0 %1847
  %vm1849 = vcmp.eq.f32.partialorder %v1846, %v1848
  %v1850 = vsel %vm1849, %v1845, inf
  %1851 = vmin.xlane.f32.xlu0 %v1850
  %v1852 = vpop.xlane.xlu0 %1851
  %v1853 = vcvt.f32.s32 %v1852
  %v1854 = vcvt.f32.s32 %v1848
  %v1855 = vshll.u32 %v1854, 16
  %v1856 = vadd.s32 %v1855, %v1853
  %v1857 = vsel %vm647, %v1779, 2147483647
  %v1858 = vand.u32 %v1857, 65535
  %v1859 = vshra.s32 %v1857, 16
  %v1860 = vcvt.s32.f32 %v1858
  %v1861 = vcvt.s32.f32 %v1859
  %1862 = vmin.xlane.f32.xlu0 %v1861
  %v1863 = vpop.xlane.xlu0 %1862
  %vm1864 = vcmp.eq.f32.partialorder %v1861, %v1863
  %v1865 = vsel %vm1864, %v1860, inf
  %1866 = vmin.xlane.f32.xlu0 %v1865
  %v1867 = vpop.xlane.xlu0 %1866
  %v1868 = vcvt.f32.s32 %v1867
  %v1869 = vcvt.f32.s32 %v1863
  %v1870 = vshll.u32 %v1869, 16
  %v1871 = vadd.s32 %v1870, %v1868
  %v1872 = vsel %vm647, %v1780, 2147483647
  %v1873 = vand.u32 %v1872, 65535
  %v1874 = vshra.s32 %v1872, 16
  %v1875 = vcvt.s32.f32 %v1873
  %v1876 = vcvt.s32.f32 %v1874
  %1877 = vmin.xlane.f32.xlu0 %v1876
  %v1878 = vpop.xlane.xlu0 %1877
  %vm1879 = vcmp.eq.f32.partialorder %v1876, %v1878
  %v1880 = vsel %vm1879, %v1875, inf
  %1881 = vmin.xlane.f32.xlu0 %v1880
  %v1882 = vpop.xlane.xlu0 %1881
  %v1883 = vcvt.f32.s32 %v1882
  %v1884 = vcvt.f32.s32 %v1878
  %v1885 = vshll.u32 %v1884, 16
  %v1886 = vadd.s32 %v1885, %v1883
  %v1887 = vsel %vm647, %v1781, 2147483647
  %v1888 = vand.u32 %v1887, 65535
  %v1889 = vshra.s32 %v1887, 16
  %v1890 = vcvt.s32.f32 %v1888
  %v1891 = vcvt.s32.f32 %v1889
  %1892 = vmin.xlane.f32.xlu0 %v1891
  %v1893 = vpop.xlane.xlu0 %1892
  %vm1894 = vcmp.eq.f32.partialorder %v1891, %v1893
  %v1895 = vsel %vm1894, %v1890, inf
  %1896 = vmin.xlane.f32.xlu0 %v1895
  %v1897 = vpop.xlane.xlu0 %1896
  %v1898 = vcvt.f32.s32 %v1897
  %v1899 = vcvt.f32.s32 %v1893
  %v1900 = vshll.u32 %v1899, 16
  %v1901 = vadd.s32 %v1900, %v1898
  %vm1902 = vcmask 23568
  %1903 = vst.msk [vmem:[%s6] sm:$0xff] %vm1902, %v1796
  %1904 = vst.msk [vmem:[%s6 + $0x8] sm:$0xff] %vm1902, %v1811
  %1905 = vst.msk [vmem:[%s6 + $0x10] sm:$0xff] %vm1902, %v1826
  %1906 = vst.msk [vmem:[%s6 + $0x18] sm:$0xff] %vm1902, %v1841
  %1907 = vst.msk [vmem:[%s6 + $0x20] sm:$0xff] %vm1902, %v1856
  %1908 = vst.msk [vmem:[%s6 + $0x28] sm:$0xff] %vm1902, %v1871
  %1909 = vst.msk [vmem:[%s6 + $0x30] sm:$0xff] %vm1902, %v1886
  %1910 = vst.msk [vmem:[%s6 + $0x38] sm:$0xff] %vm1902, %v1901
  %v1911 = vsub.f32 %v1686, %v1744
  %v1912 = vsub.f32 %v1687, %v1747
  %v1913 = vsub.f32 %v1688, %v1750
  %v1914 = vsub.f32 %v1689, %v1753
  %v1915 = vsub.f32 %v1690, %v1756
  %v1916 = vsub.f32 %v1691, %v1759
  %v1917 = vsub.f32 %v1692, %v1762
  %v1918 = vsub.f32 %v1693, %v1765
  %1919 = vst.msk [vmem:[%s7] sm:$0xff] %vm1902, %v1911
  %1920 = vst.msk [vmem:[%s7 + $0x8] sm:$0xff] %vm1902, %v1912
  %1921 = vst.msk [vmem:[%s7 + $0x10] sm:$0xff] %vm1902, %v1913
  %1922 = vst.msk [vmem:[%s7 + $0x18] sm:$0xff] %vm1902, %v1914
  %1923 = vst.msk [vmem:[%s7 + $0x20] sm:$0xff] %vm1902, %v1915
  %1924 = vst.msk [vmem:[%s7 + $0x28] sm:$0xff] %vm1902, %v1916
  %1925 = vst.msk [vmem:[%s7 + $0x30] sm:$0xff] %vm1902, %v1917
  %1926 = vst.msk [vmem:[%s7 + $0x38] sm:$0xff] %vm1902, %v1918
  // Predicated region
  $region26: #{attackers_forward.1} parent=0 // pred_check
    _
  $region27: #{attackers_forward.1} parent=0 // pred_check_branch
    %1928 = sbr.rel (0) target = $region29
  $region28: #{attackers_forward.1} parent=0 // pred_region
    _
  $region29: #{attackers_forward.1} parent=0 // pred_fallthru
    _
  // Predicated region
  $region30: #{attackers_forward.1} parent=0 // pred_check
    _
  $region31: #{attackers_forward.1} parent=0 // pred_check_branch
    %1930 = sbr.rel (0) target = $region33
  $region32: #{attackers_forward.1} parent=0 // pred_region
    _
  $region33: #{attackers_forward.1} parent=0 // pred_fallthru
    _
  // Predicated region
  $region34: #{attackers_forward.1} parent=0 // pred_check
    _
  $region35: #{attackers_forward.1} parent=0 // pred_check_branch
    %1932 = sbr.rel (0) target = $region37
  $region36: #{attackers_forward.1} parent=0 // pred_region
    _
  $region37: #{attackers_forward.1} parent=0 // pred_fallthru
    _
  // Predicated region
  $region38: #{attackers_forward.1} parent=0 // pred_check
    _
  $region39: #{attackers_forward.1} parent=0 // pred_check_branch
    %1934 = sbr.rel (0) target = $region41
  $region40: #{attackers_forward.1} parent=0 // pred_region
    _
  $region41: #{attackers_forward.1} parent=0 // pred_fallthru
    _

</llo_original>
